<compile_context>
chip_gen: v6e
topology: v6e:2x2x1
jax: 0.10.0
libtpu: 0.0.40
codegen_flags: <defaults>
</compile_context>

<pallas_src>
import functools
import math

import jax
import jax.numpy as jnp
from jax.experimental import pallas as pl
from jax.experimental.pallas import tpu as pltpu


# ---------------------------------------------------------------------------
# Kernel 1: fused QKV projection (tiled contraction) + per-head rotary emb.
# ---------------------------------------------------------------------------
def qkv_rope_kernel(x_ref, wq_ref, wk_ref, wv_ref, cos_ref, sin_ref, rot_ref,
                    xq_ref, xk_ref, xv_ref, accq_ref, acck_ref, accv_ref,
                    *, n_heads, n_kv_heads, head_dim, scale):
    kd = pl.program_id(1)

    @pl.when(kd == 0)
    def _init():
        accq_ref[...] = jnp.zeros(accq_ref.shape, jnp.float32)
        acck_ref[...] = jnp.zeros(acck_ref.shape, jnp.float32)
        accv_ref[...] = jnp.zeros(accv_ref.shape, jnp.float32)

    x = x_ref[...]                                   # (tile_s, tile_d) bf16
    accq_ref[...] += jnp.dot(x, wq_ref[...], preferred_element_type=jnp.float32)
    acck_ref[...] += jnp.dot(x, wk_ref[...], preferred_element_type=jnp.float32)
    accv_ref[...] += jnp.dot(x, wv_ref[...], preferred_element_type=jnp.float32)

    @pl.when(kd == pl.num_programs(1) - 1)
    def _finalize():
        cos = cos_ref[...]                           # (tile_s, head_dim) f32
        sin = sin_ref[...]
        rot = rot_ref[...]                           # (head_dim, head_dim) f32
        # fold the 1/sqrt(head_dim) softmax scale into q here (free)
        cos_q = cos * scale
        sin_q = sin * scale

        def rope(v, c, s):
            # interleaved (even, odd) pair rotation via a small per-head
            # permutation/sign matrix on the MXU (no cross-lane shuffles).
            v_rot = jnp.dot(v, rot, preferred_element_type=jnp.float32)
            return v * c + v_rot * s

        for h in range(n_heads):
            sl = slice(h * head_dim, (h + 1) * head_dim)
            xq_ref[:, sl] = rope(accq_ref[:, sl], cos_q, sin_q).astype(xq_ref.dtype)
        for h in range(n_kv_heads):
            sl = slice(h * head_dim, (h + 1) * head_dim)
            xk_ref[:, sl] = rope(acck_ref[:, sl], cos, sin).astype(xk_ref.dtype)
        xv_ref[...] = accv_ref[...].astype(xv_ref.dtype)


# ---------------------------------------------------------------------------
# Kernel 2: flash attention grouped by KV head (GQA); flat in / flat out.
#   grid = (n_kv_heads [parallel], q tiles [parallel], kv tiles [arbitrary])
# ---------------------------------------------------------------------------
def attn_kernel(q_ref, k_ref, v_ref, o_ref, m_scr, l_scr, acc_scr,
                *, repeats, head_dim):
    j = pl.program_id(2)

    @pl.when(j == 0)
    def _init():
        m_scr[...] = jnp.full(m_scr.shape, -jnp.inf, jnp.float32)
        l_scr[...] = jnp.zeros(l_scr.shape, jnp.float32)
        acc_scr[...] = jnp.zeros(acc_scr.shape, jnp.float32)

    k = k_ref[...]                                   # (tile_kv, head_dim) bf16
    v = v_ref[...]                                   # (tile_kv, head_dim) bf16

    for r in range(repeats):                         # query heads of this group
        q_r = q_ref[:, r * head_dim:(r + 1) * head_dim]   # (tile_q, hd) bf16, pre-scaled
        s = jax.lax.dot_general(q_r, k, (((1,), (1,)), ((), ())),
                                preferred_element_type=jnp.float32)  # (tq, tkv)
        m_prev = m_scr[r]                            # (tile_q, 1)
        m_new = jnp.maximum(m_prev, jnp.max(s, axis=-1, keepdims=True))
        alpha = jnp.exp(m_prev - m_new)
        p = jnp.exp(s - m_new)
        l_scr[r] = alpha * l_scr[r] + jnp.sum(p, axis=-1, keepdims=True)
        acc_scr[r] = alpha * acc_scr[r] + jnp.dot(
            p.astype(v.dtype), v, preferred_element_type=jnp.float32)
        m_scr[r] = m_new

    @pl.when(j == pl.num_programs(2) - 1)
    def _finalize():
        for r in range(repeats):
            inv_l = pl.reciprocal(l_scr[r], approx=True)
            o_ref[:, r * head_dim:(r + 1) * head_dim] = (
                acc_scr[r] * inv_l).astype(o_ref.dtype)


# ---------------------------------------------------------------------------
# Kernel 3: output projection (tiled contraction over Wq).
# ---------------------------------------------------------------------------
def out_proj_kernel(a_ref, wo_ref, o_ref, acc_ref):
    kd = pl.program_id(1)

    @pl.when(kd == 0)
    def _init():
        acc_ref[...] = jnp.zeros(acc_ref.shape, jnp.float32)

    acc_ref[...] += jnp.dot(a_ref[...], wo_ref[...],
                            preferred_element_type=jnp.float32)

    @pl.when(kd == pl.num_programs(1) - 1)
    def _finalize():
        o_ref[...] = acc_ref[...].astype(o_ref.dtype)


# ---------------------------------------------------------------------------
# Glue
# ---------------------------------------------------------------------------
def _pair_rot_matrix(width: int) -> jnp.ndarray:
    """P such that (v @ P)[2j] = -v[2j+1], (v @ P)[2j+1] = v[2j]."""
    idx = jnp.arange(width)
    even_i = idx[0::2]
    odd_i = idx[1::2]
    P = jnp.zeros((width, width), jnp.float32)
    P = P.at[even_i + 1, even_i].set(-1.0)   # column 2j   <- -v[2j+1]
    P = P.at[odd_i - 1, odd_i].set(1.0)      # column 2j+1 <-  v[2j]
    return P


_VMEM_LIMIT = 48 * 1024 * 1024   # explicit scoped-VMEM budget (fits v5e/v6e/v7x)


def attention_forward(x, wq, wk, wv, wo, cos, sin,
                      n_heads, n_kv_heads, head_dim,
                      *, compute_dtype=jnp.bfloat16):
    """x: (S, dim); wq/wk/wv/wo in PyTorch Linear (out, in) layout;
    cos/sin: (S, head_dim // 2) = real/imag of freqs_cis."""
    S, D = x.shape
    repeats = n_heads // n_kv_heads
    Wq = n_heads * head_dim
    Wk = n_kv_heads * head_dim
    scale = 1.0 / math.sqrt(head_dim)
    cdt = compute_dtype

    # tile sizes (clamped to the problem; production defaults keep each call
    # well under a 48 MiB scoped-VMEM budget, re-derived for v7x's 64 MiB)
    tile_s = min(128, S)
    tile_d = min(512, D)
    tile_q = min(128, S)
    tile_kv = min(512, S)
    tile_k = min(512, Wq)
    assert S % tile_s == 0 and D % tile_d == 0
    assert S % tile_q == 0 and S % tile_kv == 0 and Wq % tile_k == 0

    # weights pre-transposed to (in, out) and cast to the matmul dtype
    wq_t = wq.T.astype(cdt)
    wk_t = wk.T.astype(cdt)
    wv_t = wv.T.astype(cdt)
    wo_t = wo.T.astype(cdt)
    x_c = x.astype(cdt)

    # cos/sin expanded only to (S, head_dim) (interleaved), never to (S, Wq)
    cos_e = jnp.repeat(cos, 2, axis=-1).astype(jnp.float32)
    sin_e = jnp.repeat(sin, 2, axis=-1).astype(jnp.float32)
    rot = _pair_rot_matrix(head_dim)

    # --- Kernel 1: QKV projection + RoPE (rows parallel, contraction last) ---
    qkv_fn = functools.partial(qkv_rope_kernel, n_heads=n_heads,
                               n_kv_heads=n_kv_heads, head_dim=head_dim,
                               scale=scale)
    xq, xk, xv = pl.pallas_call(
        qkv_fn,
        grid=(S // tile_s, D // tile_d),
        in_specs=[
            pl.BlockSpec((tile_s, tile_d), lambda i, kd: (i, kd)),
            pl.BlockSpec((tile_d, Wq), lambda i, kd: (kd, 0)),
            pl.BlockSpec((tile_d, Wk), lambda i, kd: (kd, 0)),
            pl.BlockSpec((tile_d, Wk), lambda i, kd: (kd, 0)),
            pl.BlockSpec((tile_s, head_dim), lambda i, kd: (i, 0)),
            pl.BlockSpec((tile_s, head_dim), lambda i, kd: (i, 0)),
            pl.BlockSpec((head_dim, head_dim), lambda i, kd: (0, 0)),
        ],
        out_specs=(
            pl.BlockSpec((tile_s, Wq), lambda i, kd: (i, 0)),
            pl.BlockSpec((tile_s, Wk), lambda i, kd: (i, 0)),
            pl.BlockSpec((tile_s, Wk), lambda i, kd: (i, 0)),
        ),
        out_shape=(
            jax.ShapeDtypeStruct((S, Wq), cdt),
            jax.ShapeDtypeStruct((S, Wk), cdt),
            jax.ShapeDtypeStruct((S, Wk), cdt),
        ),
        scratch_shapes=[
            pltpu.VMEM((tile_s, Wq), jnp.float32),
            pltpu.VMEM((tile_s, Wk), jnp.float32),
            pltpu.VMEM((tile_s, Wk), jnp.float32),
        ],
        compiler_params=pltpu.CompilerParams(
            dimension_semantics=("parallel", "arbitrary"),
            vmem_limit_bytes=_VMEM_LIMIT),
    )(x_c, wq_t, wk_t, wv_t, cos_e, sin_e, rot)

    # --- Kernel 2: flash attention, grouped by KV head, flat in / flat out ---
    attn_fn = functools.partial(attn_kernel, repeats=repeats, head_dim=head_dim)
    attn_flat = pl.pallas_call(
        attn_fn,
        grid=(n_kv_heads, S // tile_q, S // tile_kv),
        in_specs=[
            pl.BlockSpec((tile_q, repeats * head_dim), lambda g, i, j: (i, g)),
            pl.BlockSpec((tile_kv, head_dim), lambda g, i, j: (j, g)),
            pl.BlockSpec((tile_kv, head_dim), lambda g, i, j: (j, g)),
        ],
        out_specs=pl.BlockSpec((tile_q, repeats * head_dim),
                               lambda g, i, j: (i, g)),
        out_shape=jax.ShapeDtypeStruct((S, Wq), cdt),
        scratch_shapes=[
            pltpu.VMEM((repeats, tile_q, 1), jnp.float32),        # running max
            pltpu.VMEM((repeats, tile_q, 1), jnp.float32),        # running denom
            pltpu.VMEM((repeats, tile_q, head_dim), jnp.float32), # running acc
        ],
        compiler_params=pltpu.CompilerParams(
            dimension_semantics=("parallel", "parallel", "arbitrary"),
            vmem_limit_bytes=_VMEM_LIMIT),
    )(xq, xk, xv)

    # --- Kernel 3: output projection (rows parallel, contraction last) ---
    out = pl.pallas_call(
        out_proj_kernel,
        grid=(S // tile_s, Wq // tile_k),
        in_specs=[
            pl.BlockSpec((tile_s, tile_k), lambda i, kd: (i, kd)),
            pl.BlockSpec((tile_k, D), lambda i, kd: (kd, 0)),
        ],
        out_specs=pl.BlockSpec((tile_s, D), lambda i, kd: (i, 0)),
        out_shape=jax.ShapeDtypeStruct((S, D), jnp.float32),
        scratch_shapes=[pltpu.VMEM((tile_s, D), jnp.float32)],
        compiler_params=pltpu.CompilerParams(
            dimension_semantics=("parallel", "arbitrary"),
            vmem_limit_bytes=_VMEM_LIMIT),
    )(attn_flat, wo_t)
    return out


# ---------------------------------------------------------------------------
# Pure-JAX reference (mirrors the PyTorch forward with cache=None)
# ---------------------------------------------------------------------------
def reference_forward(x, wq, wk, wv, wo, cos, sin, n_heads, n_kv_heads, head_dim):
    S = x.shape[0]
    xq = (x @ wq.T).reshape(S, n_heads, head_dim)
    xk = (x @ wk.T).reshape(S, n_kv_heads, head_dim)
    xv = (x @ wv.T).reshape(S, n_kv_heads, head_dim)

    fc = (cos + 1j * sin)[:, None, :]   # freqs_cis, broadcast over heads

    def rope(v):
        vc = v.reshape(*v.shape[:-1], head_dim // 2, 2)
        vz = vc[..., 0] + 1j * vc[..., 1]
        r = vz * fc
        return jnp.stack([jnp.real(r), jnp.imag(r)], axis=-1).reshape(v.shape)

    xq = rope(xq)
    xk = rope(xk)

    rep = n_heads // n_kv_heads
    k = jnp.repeat(xk, rep, axis=1)     # repeat_interleave along head axis
    v = jnp.repeat(xv, rep, axis=1)

    q_h = xq.transpose(1, 0, 2)
    k_h = k.transpose(1, 0, 2)
    v_h = v.transpose(1, 0, 2)
    s = jnp.einsum('hqd,hkd->hqk', q_h, k_h) / math.sqrt(head_dim)
    p = jax.nn.softmax(s, axis=-1)
    o = jnp.einsum('hqk,hkd->hqd', p, v_h)
    o = o.transpose(1, 0, 2).reshape(S, n_heads * head_dim)
    return o @ wo.T


if __name__ == "__main__":
    # Small ModelArgs-consistent shapes (real head_dim=128 so tiles are
    # lane-aligned; few heads / small dim / short sequence keep it tiny).
    S, D, H, KH, HD = 8, 256, 4, 2, 128   # seqlen_sum, dim, n_heads, n_kv_heads, head_dim

    key = jax.random.PRNGKey(0)
    kx, kq, kk, kv, ko = jax.random.split(key, 5)
    x = jax.random.normal(kx, (S, D), jnp.float32)
    wq = jax.random.normal(kq, (H * HD, D), jnp.float32) / math.sqrt(D)
    wk = jax.random.normal(kk, (KH * HD, D), jnp.float32) / math.sqrt(D)
    wv = jax.random.normal(kv, (KH * HD, D), jnp.float32) / math.sqrt(D)
    wo = jax.random.normal(ko, (D, H * HD), jnp.float32) / math.sqrt(H * HD)

    # freqs_cis (cos/sin halves), Llama-style
    inv_freq = 1.0 / (10000.0 ** (jnp.arange(0, HD, 2, dtype=jnp.float32) / HD))
    t = jnp.arange(S, dtype=jnp.float32)
    freqs = jnp.outer(t, inv_freq)       # (S, HD//2)
    cos, sin = jnp.cos(freqs), jnp.sin(freqs)

    out = attention_forward(x, wq, wk, wv, wo, cos, sin, H, KH, HD)
    out = jax.block_until_ready(out)

    # Reference at matched (bf16-quantized) input precision; kernel does the
    # same quantization internally, so the remaining delta is bf16 matmul /
    # approx-reciprocal error only.
    def _q(a):
        return a.astype(jnp.bfloat16).astype(jnp.float32)

    ref = reference_forward(_q(x), _q(wq), _q(wk), _q(wv), _q(wo),
                            cos, sin, H, KH, HD)
    assert out.shape == (S, D)
    err = float(jnp.max(jnp.abs(out - ref)))
    assert jnp.allclose(out, ref, atol=5e-2, rtol=5e-2), f"max abs err {err}"
    print("KERNEL_OK")
</pallas_src>

<mosaic_0001>
module attributes {stable_mosaic.version = 11 : i64} {
  func.func @qkv_rope_kernel(%arg0: i32, %arg1: i32, %arg2: memref<8x256xbf16, #tpu.memory_space<vmem>>, %arg3: memref<256x512xbf16, #tpu.memory_space<vmem>>, %arg4: memref<256x256xbf16, #tpu.memory_space<vmem>>, %arg5: memref<256x256xbf16, #tpu.memory_space<vmem>>, %arg6: memref<8x128xf32, #tpu.memory_space<vmem>>, %arg7: memref<8x128xf32, #tpu.memory_space<vmem>>, %arg8: memref<128x128xf32, #tpu.memory_space<vmem>>, %arg9: memref<8x512xbf16, #tpu.memory_space<vmem>>, %arg10: memref<8x256xbf16, #tpu.memory_space<vmem>>, %arg11: memref<8x256xbf16, #tpu.memory_space<vmem>>, %arg12: memref<8x512xf32, #tpu.memory_space<vmem>>, %arg13: memref<8x256xf32, #tpu.memory_space<vmem>>, %arg14: memref<8x256xf32, #tpu.memory_space<vmem>>) attributes {dimension_semantics = [#tpu.dimension_semantics<parallel>, #tpu.dimension_semantics<arbitrary>], iteration_bounds = array<i64: 1, 1>, scalar_prefetch = 0 : i64, scratch_operands = 3 : i64, tpu.core_type = #tpu.core_type<tc>, window_params = [{transform_indices = @transform_0, window_bounds = array<i64: 8, 256>}, {transform_indices = @transform_1, window_bounds = array<i64: 256, 512>}, {transform_indices = @transform_2, window_bounds = array<i64: 256, 256>}, {transform_indices = @transform_3, window_bounds = array<i64: 256, 256>}, {transform_indices = @transform_4, window_bounds = array<i64: 8, 128>}, {transform_indices = @transform_5, window_bounds = array<i64: 8, 128>}, {pipeline_mode = #tpu.pipeline_mode<synchronous>, transform_indices = @transform_6, window_bounds = array<i64: 128, 128>}, {transform_indices = @transform_7, window_bounds = array<i64: 8, 512>}, {transform_indices = @transform_8, window_bounds = array<i64: 8, 256>}, {transform_indices = @transform_9, window_bounds = array<i64: 8, 256>}]} {
    %c0_i32 = arith.constant 0 : i32
    %0 = arith.cmpi eq, %arg1, %c0_i32 : i32
    %1 = arith.extui %0 : i1 to i32
    %c0_i32_0 = arith.constant 0 : i32
    %2 = arith.cmpi ne, %1, %c0_i32_0 : i32
    scf.if %2 {
      %cst_24 = arith.constant 0.000000e+00 : f32
      %22 = vector.broadcast %cst_24 : f32 to vector<8x512xf32>
      %c0_25 = arith.constant 0 : index
      %c0_26 = arith.constant 0 : index
      %23 = vector.load %arg12[%c0_25, %c0_26] : memref<8x512xf32, #tpu.memory_space<vmem>>, vector<8x512xf32>
      tpu.vector_store %arg12[%c0_25, %c0_26], %22 {strides = array<i32>} : memref<8x512xf32, #tpu.memory_space<vmem>>, vector<8x512xf32>,
      %cst_27 = arith.constant 0.000000e+00 : f32
      %24 = vector.broadcast %cst_27 : f32 to vector<8x256xf32>
      %c0_28 = arith.constant 0 : index
      %c0_29 = arith.constant 0 : index
      %25 = vector.load %arg13[%c0_28, %c0_29] : memref<8x256xf32, #tpu.memory_space<vmem>>, vector<8x256xf32>
      tpu.vector_store %arg13[%c0_28, %c0_29], %24 {strides = array<i32>} : memref<8x256xf32, #tpu.memory_space<vmem>>, vector<8x256xf32>,
      %cst_30 = arith.constant 0.000000e+00 : f32
      %26 = vector.broadcast %cst_30 : f32 to vector<8x256xf32>
      %c0_31 = arith.constant 0 : index
      %c0_32 = arith.constant 0 : index
      %27 = vector.load %arg14[%c0_31, %c0_32] : memref<8x256xf32, #tpu.memory_space<vmem>>, vector<8x256xf32>
      tpu.vector_store %arg14[%c0_31, %c0_32], %26 {strides = array<i32>} : memref<8x256xf32, #tpu.memory_space<vmem>>, vector<8x256xf32>,
    } else {
    }
    %c0 = arith.constant 0 : index
    %c0_1 = arith.constant 0 : index
    %3 = vector.load %arg2[%c0, %c0_1] : memref<8x256xbf16, #tpu.memory_space<vmem>>, vector<8x256xbf16>
    %c0_2 = arith.constant 0 : index
    %c0_3 = arith.constant 0 : index
    %4 = vector.load %arg12[%c0_2, %c0_3] : memref<8x512xf32, #tpu.memory_space<vmem>>, vector<8x512xf32>
    %c0_4 = arith.constant 0 : index
    %c0_5 = arith.constant 0 : index
    %5 = vector.load %arg3[%c0_4, %c0_5] : memref<256x512xbf16, #tpu.memory_space<vmem>>, vector<256x512xbf16>
    %cst = arith.constant dense<0.000000e+00> : vector<8x512xf32>
    %6 = tpu.matmul %3, %5, %cst {dimension_numbers = #tpu.dot_dimension_numbers<[1], [0], [0], [1], [0, 0, 1, 1], [], []>} : vector<8x256xbf16>, vector<256x512xbf16>, vector<8x512xf32> -> vector<8x512xf32>
    %7 = arith.addf %4, %6 : vector<8x512xf32>
    %c0_6 = arith.constant 0 : index
    %c0_7 = arith.constant 0 : index
    %8 = vector.load %arg12[%c0_6, %c0_7] : memref<8x512xf32, #tpu.memory_space<vmem>>, vector<8x512xf32>
    tpu.vector_store %arg12[%c0_6, %c0_7], %7 {strides = array<i32>} : memref<8x512xf32, #tpu.memory_space<vmem>>, vector<8x512xf32>,
    %c0_8 = arith.constant 0 : index
    %c0_9 = arith.constant 0 : index
    %9 = vector.load %arg13[%c0_8, %c0_9] : memref<8x256xf32, #tpu.memory_space<vmem>>, vector<8x256xf32>
    %c0_10 = arith.constant 0 : index
    %c0_11 = arith.constant 0 : index
    %10 = vector.load %arg4[%c0_10, %c0_11] : memref<256x256xbf16, #tpu.memory_space<vmem>>, vector<256x256xbf16>
    %cst_12 = arith.constant dense<0.000000e+00> : vector<8x256xf32>
    %11 = tpu.matmul %3, %10, %cst_12 {dimension_numbers = #tpu.dot_dimension_numbers<[1], [0], [0], [1], [0, 0, 1, 1], [], []>} : vector<8x256xbf16>, vector<256x256xbf16>, vector<8x256xf32> -> vector<8x256xf32>
    %12 = arith.addf %9, %11 : vector<8x256xf32>
    %c0_13 = arith.constant 0 : index
    %c0_14 = arith.constant 0 : index
    %13 = vector.load %arg13[%c0_13, %c0_14] : memref<8x256xf32, #tpu.memory_space<vmem>>, vector<8x256xf32>
    tpu.vector_store %arg13[%c0_13, %c0_14], %12 {strides = array<i32>} : memref<8x256xf32, #tpu.memory_space<vmem>>, vector<8x256xf32>,
    %c0_15 = arith.constant 0 : index
    %c0_16 = arith.constant 0 : index
    %14 = vector.load %arg14[%c0_15, %c0_16] : memref<8x256xf32, #tpu.memory_space<vmem>>, vector<8x256xf32>
    %c0_17 = arith.constant 0 : index
    %c0_18 = arith.constant 0 : index
    %15 = vector.load %arg5[%c0_17, %c0_18] : memref<256x256xbf16, #tpu.memory_space<vmem>>, vector<256x256xbf16>
    %cst_19 = arith.constant dense<0.000000e+00> : vector<8x256xf32>
    %16 = tpu.matmul %3, %15, %cst_19 {dimension_numbers = #tpu.dot_dimension_numbers<[1], [0], [0], [1], [0, 0, 1, 1], [], []>} : vector<8x256xbf16>, vector<256x256xbf16>, vector<8x256xf32> -> vector<8x256xf32>
    %17 = arith.addf %14, %16 : vector<8x256xf32>
    %c0_20 = arith.constant 0 : index
    %c0_21 = arith.constant 0 : index
    %18 = vector.load %arg14[%c0_20, %c0_21] : memref<8x256xf32, #tpu.memory_space<vmem>>, vector<8x256xf32>
    tpu.vector_store %arg14[%c0_20, %c0_21], %17 {strides = array<i32>} : memref<8x256xf32, #tpu.memory_space<vmem>>, vector<8x256xf32>,
    %c0_i32_22 = arith.constant 0 : i32
    %19 = arith.cmpi eq, %arg1, %c0_i32_22 : i32
    %20 = arith.extui %19 : i1 to i32
    %c0_i32_23 = arith.constant 0 : i32
    %21 = arith.cmpi ne, %20, %c0_i32_23 : i32
    scf.if %21 {
      %c0_24 = arith.constant 0 : index
      %c0_25 = arith.constant 0 : index
      %22 = vector.load %arg6[%c0_24, %c0_25] : memref<8x128xf32, #tpu.memory_space<vmem>>, vector<8x128xf32>
      %c0_26 = arith.constant 0 : index
      %c0_27 = arith.constant 0 : index
      %23 = vector.load %arg7[%c0_26, %c0_27] : memref<8x128xf32, #tpu.memory_space<vmem>>, vector<8x128xf32>
      %c0_28 = arith.constant 0 : index
      %c0_29 = arith.constant 0 : index
      %24 = vector.load %arg8[%c0_28, %c0_29] : memref<128x128xf32, #tpu.memory_space<vmem>>, vector<128x128xf32>
      %cst_30 = arith.constant 0.0883883461 : f32
      %25 = vector.broadcast %cst_30 : f32 to vector<8x128xf32>
      %26 = arith.mulf %22, %25 : vector<8x128xf32>
      %cst_31 = arith.constant 0.0883883461 : f32
      %27 = vector.broadcast %cst_31 : f32 to vector<8x128xf32>
      %28 = arith.mulf %23, %27 : vector<8x128xf32>
      %c0_32 = arith.constant 0 : index
      %c0_33 = arith.constant 0 : index
      %29 = vector.load %arg12[%c0_32, %c0_33] : memref<8x512xf32, #tpu.memory_space<vmem>>, vector<8x128xf32>
      %cst_34 = arith.constant dense<0.000000e+00> : vector<8x128xf32>
      %30 = tpu.matmul %29, %24, %cst_34 {dimension_numbers = #tpu.dot_dimension_numbers<[1], [0], [0], [1], [0, 0, 1, 1], [], []>} : vector<8x128xf32>, vector<128x128xf32>, vector<8x128xf32> -> vector<8x128xf32>
      %31 = arith.mulf %29, %26 : vector<8x128xf32>
      %32 = arith.mulf %30, %28 : vector<8x128xf32>
      %33 = arith.addf %31, %32 : vector<8x128xf32>
      %34 = arith.truncf %33 : vector<8x128xf32> to vector<8x128xbf16>
      %c0_35 = arith.constant 0 : index
      %c0_36 = arith.constant 0 : index
      %35 = vector.load %arg9[%c0_35, %c0_36] : memref<8x512xbf16, #tpu.memory_space<vmem>>, vector<8x128xbf16>
      tpu.vector_store %arg9[%c0_35, %c0_36], %34 {strides = array<i32>} : memref<8x512xbf16, #tpu.memory_space<vmem>>, vector<8x128xbf16>,
      %c0_37 = arith.constant 0 : index
      %c128 = arith.constant 128 : index
      %36 = vector.load %arg12[%c0_37, %c128] : memref<8x512xf32, #tpu.memory_space<vmem>>, vector<8x128xf32>
      %cst_38 = arith.constant dense<0.000000e+00> : vector<8x128xf32>
      %37 = tpu.matmul %36, %24, %cst_38 {dimension_numbers = #tpu.dot_dimension_numbers<[1], [0], [0], [1], [0, 0, 1, 1], [], []>} : vector<8x128xf32>, vector<128x128xf32>, vector<8x128xf32> -> vector<8x128xf32>
      %38 = arith.mulf %36, %26 : vector<8x128xf32>
      %39 = arith.mulf %37, %28 : vector<8x128xf32>
      %40 = arith.addf %38, %39 : vector<8x128xf32>
      %41 = arith.truncf %40 : vector<8x128xf32> to vector<8x128xbf16>
      %c0_39 = arith.constant 0 : index
      %c128_40 = arith.constant 128 : index
      %42 = vector.load %arg9[%c0_39, %c128_40] : memref<8x512xbf16, #tpu.memory_space<vmem>>, vector<8x128xbf16>
      tpu.vector_store %arg9[%c0_39, %c128_40], %41 {strides = array<i32>} : memref<8x512xbf16, #tpu.memory_space<vmem>>, vector<8x128xbf16>,
      %c0_41 = arith.constant 0 : index
      %c256 = arith.constant 256 : index
      %43 = vector.load %arg12[%c0_41, %c256] : memref<8x512xf32, #tpu.memory_space<vmem>>, vector<8x128xf32>
      %cst_42 = arith.constant dense<0.000000e+00> : vector<8x128xf32>
      %44 = tpu.matmul %43, %24, %cst_42 {dimension_numbers = #tpu.dot_dimension_numbers<[1], [0], [0], [1], [0, 0, 1, 1], [], []>} : vector<8x128xf32>, vector<128x128xf32>, vector<8x128xf32> -> vector<8x128xf32>
      %45 = arith.mulf %43, %26 : vector<8x128xf32>
      %46 = arith.mulf %44, %28 : vector<8x128xf32>
      %47 = arith.addf %45, %46 : vector<8x128xf32>
      %48 = arith.truncf %47 : vector<8x128xf32> to vector<8x128xbf16>
      %c0_43 = arith.constant 0 : index
      %c256_44 = arith.constant 256 : index
      %49 = vector.load %arg9[%c0_43, %c256_44] : memref<8x512xbf16, #tpu.memory_space<vmem>>, vector<8x128xbf16>
      tpu.vector_store %arg9[%c0_43, %c256_44], %48 {strides = array<i32>} : memref<8x512xbf16, #tpu.memory_space<vmem>>, vector<8x128xbf16>,
      %c0_45 = arith.constant 0 : index
      %c384 = arith.constant 384 : index
      %50 = vector.load %arg12[%c0_45, %c384] : memref<8x512xf32, #tpu.memory_space<vmem>>, vector<8x128xf32>
      %cst_46 = arith.constant dense<0.000000e+00> : vector<8x128xf32>
      %51 = tpu.matmul %50, %24, %cst_46 {dimension_numbers = #tpu.dot_dimension_numbers<[1], [0], [0], [1], [0, 0, 1, 1], [], []>} : vector<8x128xf32>, vector<128x128xf32>, vector<8x128xf32> -> vector<8x128xf32>
      %52 = arith.mulf %50, %26 : vector<8x128xf32>
      %53 = arith.mulf %51, %28 : vector<8x128xf32>
      %54 = arith.addf %52, %53 : vector<8x128xf32>
      %55 = arith.truncf %54 : vector<8x128xf32> to vector<8x128xbf16>
      %c0_47 = arith.constant 0 : index
      %c384_48 = arith.constant 384 : index
      %56 = vector.load %arg9[%c0_47, %c384_48] : memref<8x512xbf16, #tpu.memory_space<vmem>>, vector<8x128xbf16>
      tpu.vector_store %arg9[%c0_47, %c384_48], %55 {strides = array<i32>} : memref<8x512xbf16, #tpu.memory_space<vmem>>, vector<8x128xbf16>,
      %c0_49 = arith.constant 0 : index
      %c0_50 = arith.constant 0 : index
      %57 = vector.load %arg13[%c0_49, %c0_50] : memref<8x256xf32, #tpu.memory_space<vmem>>, vector<8x128xf32>
      %cst_51 = arith.constant dense<0.000000e+00> : vector<8x128xf32>
      %58 = tpu.matmul %57, %24, %cst_51 {dimension_numbers = #tpu.dot_dimension_numbers<[1], [0], [0], [1], [0, 0, 1, 1], [], []>} : vector<8x128xf32>, vector<128x128xf32>, vector<8x128xf32> -> vector<8x128xf32>
      %59 = arith.mulf %57, %22 : vector<8x128xf32>
      %60 = arith.mulf %58, %23 : vector<8x128xf32>
      %61 = arith.addf %59, %60 : vector<8x128xf32>
      %62 = arith.truncf %61 : vector<8x128xf32> to vector<8x128xbf16>
      %c0_52 = arith.constant 0 : index
      %c0_53 = arith.constant 0 : index
      %63 = vector.load %arg10[%c0_52, %c0_53] : memref<8x256xbf16, #tpu.memory_space<vmem>>, vector<8x128xbf16>
      tpu.vector_store %arg10[%c0_52, %c0_53], %62 {strides = array<i32>} : memref<8x256xbf16, #tpu.memory_space<vmem>>, vector<8x128xbf16>,
      %c0_54 = arith.constant 0 : index
      %c128_55 = arith.constant 128 : index
      %64 = vector.load %arg13[%c0_54, %c128_55] : memref<8x256xf32, #tpu.memory_space<vmem>>, vector<8x128xf32>
      %cst_56 = arith.constant dense<0.000000e+00> : vector<8x128xf32>
      %65 = tpu.matmul %64, %24, %cst_56 {dimension_numbers = #tpu.dot_dimension_numbers<[1], [0], [0], [1], [0, 0, 1, 1], [], []>} : vector<8x128xf32>, vector<128x128xf32>, vector<8x128xf32> -> vector<8x128xf32>
      %66 = arith.mulf %64, %22 : vector<8x128xf32>
      %67 = arith.mulf %65, %23 : vector<8x128xf32>
      %68 = arith.addf %66, %67 : vector<8x128xf32>
      %69 = arith.truncf %68 : vector<8x128xf32> to vector<8x128xbf16>
      %c0_57 = arith.constant 0 : index
      %c128_58 = arith.constant 128 : index
      %70 = vector.load %arg10[%c0_57, %c128_58] : memref<8x256xbf16, #tpu.memory_space<vmem>>, vector<8x128xbf16>
      tpu.vector_store %arg10[%c0_57, %c128_58], %69 {strides = array<i32>} : memref<8x256xbf16, #tpu.memory_space<vmem>>, vector<8x128xbf16>,
      %c0_59 = arith.constant 0 : index
      %c0_60 = arith.constant 0 : index
      %71 = vector.load %arg14[%c0_59, %c0_60] : memref<8x256xf32, #tpu.memory_space<vmem>>, vector<8x256xf32>
      %72 = arith.truncf %71 : vector<8x256xf32> to vector<8x256xbf16>
      %c0_61 = arith.constant 0 : index
      %c0_62 = arith.constant 0 : index
      %73 = vector.load %arg11[%c0_61, %c0_62] : memref<8x256xbf16, #tpu.memory_space<vmem>>, vector<8x256xbf16>
      tpu.vector_store %arg11[%c0_61, %c0_62], %72 {strides = array<i32>} : memref<8x256xbf16, #tpu.memory_space<vmem>>, vector<8x256xbf16>,
    } else {
    }
    return
  }
  func.func @transform_0(%arg0: i32, %arg1: i32) -> (i32, i32) {
    %c0_i32 = arith.constant 0 : i32
    return %arg0, %arg1 : i32, i32
  }
  func.func @transform_1(%arg0: i32, %arg1: i32) -> (i32, i32) {
    %c0_i32 = arith.constant 0 : i32
    %c0_i32_0 = arith.constant 0 : i32
    return %arg1, %c0_i32 : i32, i32
  }
  func.func @transform_2(%arg0: i32, %arg1: i32) -> (i32, i32) {
    %c0_i32 = arith.constant 0 : i32
    %c0_i32_0 = arith.constant 0 : i32
    return %arg1, %c0_i32 : i32, i32
  }
  func.func @transform_3(%arg0: i32, %arg1: i32) -> (i32, i32) {
    %c0_i32 = arith.constant 0 : i32
    %c0_i32_0 = arith.constant 0 : i32
    return %arg1, %c0_i32 : i32, i32
  }
  func.func @transform_4(%arg0: i32, %arg1: i32) -> (i32, i32) {
    %c0_i32 = arith.constant 0 : i32
    %c0_i32_0 = arith.constant 0 : i32
    return %arg0, %c0_i32 : i32, i32
  }
  func.func @transform_5(%arg0: i32, %arg1: i32) -> (i32, i32) {
    %c0_i32 = arith.constant 0 : i32
    %c0_i32_0 = arith.constant 0 : i32
    return %arg0, %c0_i32 : i32, i32
  }
  func.func @transform_6(%arg0: i32, %arg1: i32) -> (i32, i32) {
    %c0_i32 = arith.constant 0 : i32
    %c0_i32_0 = arith.constant 0 : i32
    %c0_i32_1 = arith.constant 0 : i32
    return %c0_i32, %c0_i32_0 : i32, i32
  }
  func.func @transform_7(%arg0: i32, %arg1: i32) -> (i32, i32) {
    %c0_i32 = arith.constant 0 : i32
    %c0_i32_0 = arith.constant 0 : i32
    return %arg0, %c0_i32 : i32, i32
  }
  func.func @transform_8(%arg0: i32, %arg1: i32) -> (i32, i32) {
    %c0_i32 = arith.constant 0 : i32
    %c0_i32_0 = arith.constant 0 : i32
    return %arg0, %c0_i32 : i32, i32
  }
  func.func @transform_9(%arg0: i32, %arg1: i32) -> (i32, i32) {
    %c0_i32 = arith.constant 0 : i32
    %c0_i32_0 = arith.constant 0 : i32
    return %arg0, %c0_i32 : i32, i32
  }
}

</mosaic_0001>

<llo_original>
// kernel: tpu_custom_call.1
$region0: #{tpu_custom_call.1}
  #allocation0 [shape = 'u32[]', space=smem, size = 0x4, offset = 0x4, fixed_abs, tag = 'smem constant byte address 0x4 - core index']
  #allocation1 [shape = 'u32[144,128]{1,0:T(1,128)}', space=vmem, size = 0x12000, scoped, tag = 'internal scratch']
  #allocation2 [shape = 'f32[8,512]{1,0:T(8,128)}', space=vmem, size = 0x4000, scoped, tag = 'scratch operand']
  #allocation3 [shape = 'f32[8,256]{1,0:T(8,128)}', space=vmem, size = 0x2000, scoped, tag = 'scratch operand']
  #allocation4 [shape = 'f32[8,256]{1,0:T(8,128)}', space=vmem, size = 0x2000, scoped, tag = 'scratch operand']
  %s0 = inlined_call_operand.hbm [shape: bf16[8,256], index: 0, kind: input, shape index: {}]
  %s1 = inlined_call_operand.hbm [shape: bf16[256,512], index: 1, kind: input, shape index: {}]
  %s2 = inlined_call_operand.hbm [shape: bf16[256,256], index: 2, kind: input, shape index: {}]
  %s3 = inlined_call_operand.hbm [shape: bf16[256,256], index: 3, kind: input, shape index: {}]
  %s4 = inlined_call_operand.hbm [shape: f32[8,128], index: 4, kind: input, shape index: {}]
  %s5 = inlined_call_operand.vmem [shape: f32[8,128], index: 5, kind: input, shape index: {}]
  %s6 = inlined_call_operand.hbm [shape: f32[128,128], index: 6, kind: input, shape index: {}]
  %s7 = inlined_call_operand.hbm [shape: bf16[8,512], index: 7, kind: output, shape index: {0}]
  %s8 = inlined_call_operand.hbm [shape: bf16[8,256], index: 8, kind: output, shape index: {1}]
  %s9 = inlined_call_operand.hbm [shape: bf16[8,256], index: 9, kind: output, shape index: {2}]
  %10 = xla_tuple %s7, %s8, %s9
  %s11 = sld [smem:[#allocation0]]
  $region86: #{tpu_custom_call.1} parent=0
    _
  %s13 = ssub.s32 1, %s11
  %s14 = scalar_select 0, %s13, %s11
  $region1: #{tpu_custom_call.1} parent=0
    #allocation5 [shape = 'u8[4096]{0}', space=vmem, size = 0x1000, scoped, tag = 'input window, operand 0, single buffered']
    #allocation6 [shape = 's32[1]{0}', space=sflag, size = 0x4, scoped, tag = 'scoped memory for tpu_custom_call.1']
    #allocation7 [shape = 's32[1]{0}', space=sflag, size = 0x4, scoped, tag = 'scoped memory for tpu_custom_call.1']
    #allocation8 [shape = 'u8[262144]{0}', space=vmem, size = 0x40000, scoped, tag = 'input window, operand 1, single buffered']
    #allocation9 [shape = 's32[1]{0}', space=sflag, size = 0x4, scoped, tag = 'scoped memory for tpu_custom_call.1']
    #allocation10 [shape = 'u8[131072]{0}', space=vmem, size = 0x20000, scoped, tag = 'input window, operand 2, single buffered']
    #allocation11 [shape = 'u8[131072]{0}', space=vmem, size = 0x20000, scoped, tag = 'input window, operand 3, single buffered']
    #allocation12 [shape = 's32[1]{0}', space=sflag, size = 0x4, scoped, tag = 'scoped memory for tpu_custom_call.1']
    #allocation13 [shape = 'u8[4096]{0}', space=vmem, size = 0x1000, scoped, tag = 'input window, operand 4, single buffered']
    #allocation14 [shape = 'u8[65536]{0}', space=vmem, size = 0x10000, scoped, tag = 'input window, operand 6, single buffered']
    #allocation15 [shape = 's32[1]{0}', space=sflag, size = 0x4, scoped, tag = 'scoped memory for tpu_custom_call.1']
    #allocation16 [shape = 'u8[8192]{0}', space=vmem, size = 0x2000, scoped, tag = 'output window, operand 0, single buffered']
    #allocation17 [shape = 'u8[4096]{0}', space=vmem, size = 0x1000, scoped, tag = 'output window, operand 1, single buffered']
    #allocation18 [shape = 's32[1]{0}', space=sflag, size = 0x4, scoped, tag = 'scoped memory for tpu_custom_call.1']
    #allocation19 [shape = 'u8[4096]{0}', space=vmem, size = 0x1000, scoped, tag = 'output window, operand 2, single buffered']
    %15 = vsyncpa [#allocation6], 0
    %16 = vsyncpa [#allocation9], 0
    %17 = vsyncpa [#allocation12], 0
    %18 = vsyncpa [#allocation15], 0
    %19 = vsyncpa [#allocation7], 0
    %20 = vsyncpa [#allocation18], 0
    // Predicated region
    $region2: #{tpu_custom_call.1} parent=1 // pred_check
      _
    $region3: #{tpu_custom_call.1} parent=1 // pred_check_branch
      %22 = sbr.rel (0) target = $region5
    $region4: #{tpu_custom_call.1} parent=1 // pred_region
      %s24 = ssub.s32 128, 128
      %25 = vsyncadd [#allocation6], %s24
      %s27 = sshll.u32 [#allocation5], 4
      %s28 = int_to_ptr.vmem [resolvable:$true] %s27
      %30 = dma.hbm_to_vmem [thread:$0]  %s0, 128, %s28, [#allocation6]
    $region5: #{tpu_custom_call.1} parent=1 // pred_fallthru
      _
    // Predicated region
    $region6: #{tpu_custom_call.1} parent=1 // pred_check
      _
    $region7: #{tpu_custom_call.1} parent=1 // pred_check_branch
      %32 = sbr.rel (0) target = $region9
    $region8: #{tpu_custom_call.1} parent=1 // pred_region
      %s34 = ssub.s32 8192, 8192
      %35 = vsyncadd [#allocation9], %s34
      %s36 = sshll.u32 [#allocation8], 4
      %s37 = int_to_ptr.vmem [resolvable:$true] %s36
      %42 = dma.hbm_to_vmem [thread:$0]  %s1, 8192, %s37, [#allocation9], 256, 256, 16
    $region9: #{tpu_custom_call.1} parent=1 // pred_fallthru
      _
    // Predicated region
    $region10: #{tpu_custom_call.1} parent=1 // pred_check
      _
    $region11: #{tpu_custom_call.1} parent=1 // pred_check_branch
      %44 = sbr.rel (0) target = $region13
    $region12: #{tpu_custom_call.1} parent=1 // pred_region
      %s46 = ssub.s32 4096, 4096
      %47 = vsyncadd [#allocation9], %s46
      %s48 = sshll.u32 [#allocation10], 4
      %s49 = int_to_ptr.vmem [resolvable:$true] %s48
      %54 = dma.hbm_to_vmem [thread:$0]  %s2, 4096, %s49, [#allocation9], 128, 128, 8
    $region13: #{tpu_custom_call.1} parent=1 // pred_fallthru
      _
    // Predicated region
    $region14: #{tpu_custom_call.1} parent=1 // pred_check
      _
    $region15: #{tpu_custom_call.1} parent=1 // pred_check_branch
      %56 = sbr.rel (0) target = $region17
    $region16: #{tpu_custom_call.1} parent=1 // pred_region
      %s58 = ssub.s32 4096, 4096
      %59 = vsyncadd [#allocation12], %s58
      %s60 = sshll.u32 [#allocation11], 4
      %s61 = int_to_ptr.vmem [resolvable:$true] %s60
      %66 = dma.hbm_to_vmem [thread:$0]  %s3, 4096, %s61, [#allocation12], 128, 128, 8
    $region17: #{tpu_custom_call.1} parent=1 // pred_fallthru
      _
    // Predicated region
    $region18: #{tpu_custom_call.1} parent=1 // pred_check
      _
    $region19: #{tpu_custom_call.1} parent=1 // pred_check_branch
      %68 = sbr.rel (0) target = $region21
    $region20: #{tpu_custom_call.1} parent=1 // pred_region
      %s70 = ssub.s32 128, 128
      %71 = vsyncadd [#allocation12], %s70
      %s73 = sshll.u32 [#allocation13], 4
      %s74 = int_to_ptr.vmem [resolvable:$true] %s73
      %76 = dma.hbm_to_vmem [thread:$0]  %s4, 128, %s74, [#allocation12]
    $region21: #{tpu_custom_call.1} parent=1 // pred_fallthru
      _
    // Predicated region
    $region22: #{tpu_custom_call.1} parent=1 // pred_check
      _
    $region23: #{tpu_custom_call.1} parent=1 // pred_check_branch
      %78 = sbr.rel (0) target = $region25
    $region24: #{tpu_custom_call.1} parent=1 // pred_region
      _
    $region25: #{tpu_custom_call.1} parent=1 // pred_fallthru
      _
    // Predicated region
    $region26: #{tpu_custom_call.1} parent=1 // pred_check
      _
    $region27: #{tpu_custom_call.1} parent=1 // pred_check_branch
      %80 = sbr.rel (0) target = $region29
    $region28: #{tpu_custom_call.1} parent=1 // pred_region
      %s82 = ssub.s32 2048, 2048
      %83 = vsyncadd [#allocation15], %s82
      %s84 = sshll.u32 [#allocation14], 4
      %s85 = int_to_ptr.vmem [resolvable:$true] %s84
      %90 = dma.hbm_to_vmem [thread:$0]  %s6, 2048, %s85, [#allocation15], 128, 128, 8
    $region29: #{tpu_custom_call.1} parent=1 // pred_fallthru
      _
    // Predicated region
    $region30: #{tpu_custom_call.1} parent=1 // pred_check
      _
    $region31: #{tpu_custom_call.1} parent=1 // pred_check_branch
      %92 = sbr.rel (0) target = $region33
    $region32: #{tpu_custom_call.1} parent=1 // pred_region
      %93 = dma.done [#allocation6], 128
    $region33: #{tpu_custom_call.1} parent=1 // pred_fallthru
      _
    // Predicated region
    $region34: #{tpu_custom_call.1} parent=1 // pred_check
      _
    $region35: #{tpu_custom_call.1} parent=1 // pred_check_branch
      %95 = sbr.rel (0) target = $region37
    $region36: #{tpu_custom_call.1} parent=1 // pred_region
      %96 = dma.done [#allocation9], 8192
    $region37: #{tpu_custom_call.1} parent=1 // pred_fallthru
      _
    // Predicated region
    $region38: #{tpu_custom_call.1} parent=1 // pred_check
      _
    $region39: #{tpu_custom_call.1} parent=1 // pred_check_branch
      %98 = sbr.rel (0) target = $region41
    $region40: #{tpu_custom_call.1} parent=1 // pred_region
      %99 = dma.done [#allocation9], 4096
    $region41: #{tpu_custom_call.1} parent=1 // pred_fallthru
      _
    // Predicated region
    $region42: #{tpu_custom_call.1} parent=1 // pred_check
      _
    $region43: #{tpu_custom_call.1} parent=1 // pred_check_branch
      %101 = sbr.rel (0) target = $region45
    $region44: #{tpu_custom_call.1} parent=1 // pred_region
      %102 = dma.done [#allocation12], 4096
    $region45: #{tpu_custom_call.1} parent=1 // pred_fallthru
      _
    // Predicated region
    $region46: #{tpu_custom_call.1} parent=1 // pred_check
      _
    $region47: #{tpu_custom_call.1} parent=1 // pred_check_branch
      %104 = sbr.rel (0) target = $region49
    $region48: #{tpu_custom_call.1} parent=1 // pred_region
      %105 = dma.done [#allocation12], 128
    $region49: #{tpu_custom_call.1} parent=1 // pred_fallthru
      _
    // Predicated region
    $region50: #{tpu_custom_call.1} parent=1 // pred_check
      _
    $region51: #{tpu_custom_call.1} parent=1 // pred_check_branch
      %107 = sbr.rel (0) target = $region53
    $region52: #{tpu_custom_call.1} parent=1 // pred_region
      %108 = dma.done [#allocation15], 2048
    $region53: #{tpu_custom_call.1} parent=1 // pred_fallthru
      _
    %p109 = scmp.eq.s32.totalorder 0, 0
    // Predicated region
    $region54: #{tpu_custom_call.1} parent=1 // pred_check
      %p110 = pneg %p109
    $region55: #{tpu_custom_call.1} parent=1 // pred_check_branch
      %112 = sbr.rel (%p110) target = $region57
    $region56: #{tpu_custom_call.1} parent=1 // pred_region
      %113 = vst [vmem:[#allocation2] sm:$0xff] 0.0
      %114 = vst [vmem:[#allocation2 + $0x8] sm:$0xff] 0.0
      %115 = vst [vmem:[#allocation2 + $0x10] sm:$0xff] 0.0
      %116 = vst [vmem:[#allocation2 + $0x18] sm:$0xff] 0.0
      %117 = vst [vmem:[#allocation3] sm:$0xff] 0.0
      %118 = vst [vmem:[#allocation3 + $0x8] sm:$0xff] 0.0
      %119 = vst [vmem:[#allocation4] sm:$0xff] 0.0
      %120 = vst [vmem:[#allocation4 + $0x8] sm:$0xff] 0.0
    $region57: #{tpu_custom_call.1} parent=1 // pred_fallthru
      _
    %v121 = vld [vmem:[#allocation5] sm:$0xff]
    %v122 = vld [vmem:[#allocation2] sm:$0xff]
    %v123 = vld [vmem:[#allocation2 + $0x8] sm:$0xff]
    %v124 = vld [vmem:[#allocation2 + $0x10] sm:$0xff]
    %v125 = vld [vmem:[#allocation2 + $0x18] sm:$0xff]
    %v126 = vld [vmem:[#allocation8] sm:$0xff]
    %v127 = vld [vmem:[#allocation8 + $0x8] sm:$0xff]
    %v128 = vld [vmem:[#allocation8 + $0x10] sm:$0xff]
    %v129 = vld [vmem:[#allocation8 + $0x18] sm:$0xff]
    %v130 = vld [vmem:[#allocation8 + $0x20] sm:$0xff]
    %v131 = vld [vmem:[#allocation8 + $0x28] sm:$0xff]
    %v132 = vld [vmem:[#allocation8 + $0x30] sm:$0xff]
    %v133 = vld [vmem:[#allocation8 + $0x38] sm:$0xff]
    %v134 = vld [vmem:[#allocation8 + $0x40] sm:$0xff]
    %v135 = vld [vmem:[#allocation8 + $0x48] sm:$0xff]
    %v136 = vld [vmem:[#allocation8 + $0x50] sm:$0xff]
    %v137 = vld [vmem:[#allocation8 + $0x58] sm:$0xff]
    %v138 = vld [vmem:[#allocation8 + $0x60] sm:$0xff]
    %v139 = vld [vmem:[#allocation8 + $0x68] sm:$0xff]
    %v140 = vld [vmem:[#allocation8 + $0x70] sm:$0xff]
    %v141 = vld [vmem:[#allocation8 + $0x78] sm:$0xff]
    %v142 = vld [vmem:[#allocation8 + $0x80] sm:$0xff]
    %v143 = vld [vmem:[#allocation8 + $0x88] sm:$0xff]
    %v144 = vld [vmem:[#allocation8 + $0x90] sm:$0xff]
    %v145 = vld [vmem:[#allocation8 + $0x98] sm:$0xff]
    %v146 = vld [vmem:[#allocation8 + $0xa0] sm:$0xff]
    %v147 = vld [vmem:[#allocation8 + $0xa8] sm:$0xff]
    %v148 = vld [vmem:[#allocation8 + $0xb0] sm:$0xff]
    %v149 = vld [vmem:[#allocation8 + $0xb8] sm:$0xff]
    %v150 = vld [vmem:[#allocation8 + $0xc0] sm:$0xff]
    %v151 = vld [vmem:[#allocation8 + $0xc8] sm:$0xff]
    %v152 = vld [vmem:[#allocation8 + $0xd0] sm:$0xff]
    %v153 = vld [vmem:[#allocation8 + $0xd8] sm:$0xff]
    %v154 = vld [vmem:[#allocation8 + $0xe0] sm:$0xff]
    %v155 = vld [vmem:[#allocation8 + $0xe8] sm:$0xff]
    %v156 = vld [vmem:[#allocation8 + $0xf0] sm:$0xff]
    %v157 = vld [vmem:[#allocation8 + $0xf8] sm:$0xff]
    %v158 = vld [vmem:[#allocation8 + $0x100] sm:$0xff]
    %v159 = vld [vmem:[#allocation8 + $0x108] sm:$0xff]
    %v160 = vld [vmem:[#allocation8 + $0x110] sm:$0xff]
    %v161 = vld [vmem:[#allocation8 + $0x118] sm:$0xff]
    %v162 = vld [vmem:[#allocation8 + $0x120] sm:$0xff]
    %v163 = vld [vmem:[#allocation8 + $0x128] sm:$0xff]
    %v164 = vld [vmem:[#allocation8 + $0x130] sm:$0xff]
    %v165 = vld [vmem:[#allocation8 + $0x138] sm:$0xff]
    %v166 = vld [vmem:[#allocation8 + $0x140] sm:$0xff]
    %v167 = vld [vmem:[#allocation8 + $0x148] sm:$0xff]
    %v168 = vld [vmem:[#allocation8 + $0x150] sm:$0xff]
    %v169 = vld [vmem:[#allocation8 + $0x158] sm:$0xff]
    %v170 = vld [vmem:[#allocation8 + $0x160] sm:$0xff]
    %v171 = vld [vmem:[#allocation8 + $0x168] sm:$0xff]
    %v172 = vld [vmem:[#allocation8 + $0x170] sm:$0xff]
    %v173 = vld [vmem:[#allocation8 + $0x178] sm:$0xff]
    %v174 = vld [vmem:[#allocation8 + $0x180] sm:$0xff]
    %v175 = vld [vmem:[#allocation8 + $0x188] sm:$0xff]
    %v176 = vld [vmem:[#allocation8 + $0x190] sm:$0xff]
    %v177 = vld [vmem:[#allocation8 + $0x198] sm:$0xff]
    %v178 = vld [vmem:[#allocation8 + $0x1a0] sm:$0xff]
    %v179 = vld [vmem:[#allocation8 + $0x1a8] sm:$0xff]
    %v180 = vld [vmem:[#allocation8 + $0x1b0] sm:$0xff]
    %v181 = vld [vmem:[#allocation8 + $0x1b8] sm:$0xff]
    %v182 = vld [vmem:[#allocation8 + $0x1c0] sm:$0xff]
    %v183 = vld [vmem:[#allocation8 + $0x1c8] sm:$0xff]
    %v184 = vld [vmem:[#allocation8 + $0x1d0] sm:$0xff]
    %v185 = vld [vmem:[#allocation8 + $0x1d8] sm:$0xff]
    %v186 = vld [vmem:[#allocation8 + $0x1e0] sm:$0xff]
    %v187 = vld [vmem:[#allocation8 + $0x1e8] sm:$0xff]
    %v188 = vld [vmem:[#allocation8 + $0x1f0] sm:$0xff]
    %v189 = vld [vmem:[#allocation8 + $0x1f8] sm:$0xff]
    %v191 = vunpack.c.l.b16 %v121
    %v192 = vunpack.c.h.b16 %v121
    %v193 = vpack.c.b16 %v191, %v191
    %v194 = vpack.c.b16 %v192, %v192
    %v261 = vunpack.c.l.b16 %v126
    %v262 = vunpack.c.h.b16 %v126
    %v263 = vunpack.c.l.b16 %v127
    %v264 = vunpack.c.h.b16 %v127
    %v265 = vunpack.c.l.b16 %v128
    %v266 = vunpack.c.h.b16 %v128
    %v267 = vunpack.c.l.b16 %v129
    %v268 = vunpack.c.h.b16 %v129
    %v269 = vunpack.c.l.b16 %v130
    %v270 = vunpack.c.h.b16 %v130
    %v271 = vunpack.c.l.b16 %v131
    %v272 = vunpack.c.h.b16 %v131
    %v273 = vunpack.c.l.b16 %v132
    %v274 = vunpack.c.h.b16 %v132
    %v275 = vunpack.c.l.b16 %v133
    %v276 = vunpack.c.h.b16 %v133
    %v277 = vunpack.c.l.b16 %v134
    %v278 = vunpack.c.h.b16 %v134
    %v279 = vunpack.c.l.b16 %v135
    %v280 = vunpack.c.h.b16 %v135
    %v281 = vunpack.c.l.b16 %v136
    %v282 = vunpack.c.h.b16 %v136
    %v283 = vunpack.c.l.b16 %v137
    %v284 = vunpack.c.h.b16 %v137
    %v285 = vunpack.c.l.b16 %v138
    %v286 = vunpack.c.h.b16 %v138
    %v287 = vunpack.c.l.b16 %v139
    %v288 = vunpack.c.h.b16 %v139
    %v289 = vunpack.c.l.b16 %v140
    %v290 = vunpack.c.h.b16 %v140
    %v291 = vunpack.c.l.b16 %v141
    %v292 = vunpack.c.h.b16 %v141
    %v293 = vunpack.c.l.b16 %v142
    %v294 = vunpack.c.h.b16 %v142
    %v295 = vunpack.c.l.b16 %v143
    %v296 = vunpack.c.h.b16 %v143
    %v297 = vunpack.c.l.b16 %v144
    %v298 = vunpack.c.h.b16 %v144
    %v299 = vunpack.c.l.b16 %v145
    %v300 = vunpack.c.h.b16 %v145
    %v301 = vunpack.c.l.b16 %v146
    %v302 = vunpack.c.h.b16 %v146
    %v303 = vunpack.c.l.b16 %v147
    %v304 = vunpack.c.h.b16 %v147
    %v305 = vunpack.c.l.b16 %v148
    %v306 = vunpack.c.h.b16 %v148
    %v307 = vunpack.c.l.b16 %v149
    %v308 = vunpack.c.h.b16 %v149
    %v309 = vunpack.c.l.b16 %v150
    %v310 = vunpack.c.h.b16 %v150
    %v311 = vunpack.c.l.b16 %v151
    %v312 = vunpack.c.h.b16 %v151
    %v313 = vunpack.c.l.b16 %v152
    %v314 = vunpack.c.h.b16 %v152
    %v315 = vunpack.c.l.b16 %v153
    %v316 = vunpack.c.h.b16 %v153
    %v317 = vunpack.c.l.b16 %v154
    %v318 = vunpack.c.h.b16 %v154
    %v319 = vunpack.c.l.b16 %v155
    %v320 = vunpack.c.h.b16 %v155
    %v321 = vunpack.c.l.b16 %v156
    %v322 = vunpack.c.h.b16 %v156
    %v323 = vunpack.c.l.b16 %v157
    %v324 = vunpack.c.h.b16 %v157
    %v325 = vunpack.c.l.b16 %v158
    %v326 = vunpack.c.h.b16 %v158
    %v327 = vunpack.c.l.b16 %v159
    %v328 = vunpack.c.h.b16 %v159
    %v329 = vunpack.c.l.b16 %v160
    %v330 = vunpack.c.h.b16 %v160
    %v331 = vunpack.c.l.b16 %v161
    %v332 = vunpack.c.h.b16 %v161
    %v333 = vunpack.c.l.b16 %v162
    %v334 = vunpack.c.h.b16 %v162
    %v335 = vunpack.c.l.b16 %v163
    %v336 = vunpack.c.h.b16 %v163
    %v337 = vunpack.c.l.b16 %v164
    %v338 = vunpack.c.h.b16 %v164
    %v339 = vunpack.c.l.b16 %v165
    %v340 = vunpack.c.h.b16 %v165
    %v341 = vunpack.c.l.b16 %v166
    %v342 = vunpack.c.h.b16 %v166
    %v343 = vunpack.c.l.b16 %v167
    %v344 = vunpack.c.h.b16 %v167
    %v345 = vunpack.c.l.b16 %v168
    %v346 = vunpack.c.h.b16 %v168
    %v347 = vunpack.c.l.b16 %v169
    %v348 = vunpack.c.h.b16 %v169
    %v349 = vunpack.c.l.b16 %v170
    %v350 = vunpack.c.h.b16 %v170
    %v351 = vunpack.c.l.b16 %v171
    %v352 = vunpack.c.h.b16 %v171
    %v353 = vunpack.c.l.b16 %v172
    %v354 = vunpack.c.h.b16 %v172
    %v355 = vunpack.c.l.b16 %v173
    %v356 = vunpack.c.h.b16 %v173
    %v357 = vunpack.c.l.b16 %v174
    %v358 = vunpack.c.h.b16 %v174
    %v359 = vunpack.c.l.b16 %v175
    %v360 = vunpack.c.h.b16 %v175
    %v361 = vunpack.c.l.b16 %v176
    %v362 = vunpack.c.h.b16 %v176
    %v363 = vunpack.c.l.b16 %v177
    %v364 = vunpack.c.h.b16 %v177
    %v365 = vunpack.c.l.b16 %v178
    %v366 = vunpack.c.h.b16 %v178
    %v367 = vunpack.c.l.b16 %v179
    %v368 = vunpack.c.h.b16 %v179
    %v369 = vunpack.c.l.b16 %v180
    %v370 = vunpack.c.h.b16 %v180
    %v371 = vunpack.c.l.b16 %v181
    %v372 = vunpack.c.h.b16 %v181
    %v373 = vunpack.c.l.b16 %v182
    %v374 = vunpack.c.h.b16 %v182
    %v375 = vunpack.c.l.b16 %v183
    %v376 = vunpack.c.h.b16 %v183
    %v377 = vunpack.c.l.b16 %v184
    %v378 = vunpack.c.h.b16 %v184
    %v379 = vunpack.c.l.b16 %v185
    %v380 = vunpack.c.h.b16 %v185
    %v381 = vunpack.c.l.b16 %v186
    %v382 = vunpack.c.h.b16 %v186
    %v383 = vunpack.c.l.b16 %v187
    %v384 = vunpack.c.h.b16 %v187
    %v385 = vunpack.c.l.b16 %v188
    %v386 = vunpack.c.h.b16 %v188
    %v387 = vunpack.c.l.b16 %v189
    %v388 = vunpack.c.h.b16 %v189
    %v389 = vpack.c.b16 %v265, %v261
    %v390 = vpack.c.b16 %v266, %v262
    %v391 = vpack.c.b16 %v267, %v263
    %v392 = vpack.c.b16 %v268, %v264
    %v393 = vpack.c.b16 %v273, %v269
    %v394 = vpack.c.b16 %v274, %v270
    %v395 = vpack.c.b16 %v275, %v271
    %v396 = vpack.c.b16 %v276, %v272
    %v397 = vpack.c.b16 %v281, %v277
    %v398 = vpack.c.b16 %v282, %v278
    %v399 = vpack.c.b16 %v283, %v279
    %v400 = vpack.c.b16 %v284, %v280
    %v401 = vpack.c.b16 %v289, %v285
    %v402 = vpack.c.b16 %v290, %v286
    %v403 = vpack.c.b16 %v291, %v287
    %v404 = vpack.c.b16 %v292, %v288
    %v405 = vpack.c.b16 %v297, %v293
    %v406 = vpack.c.b16 %v298, %v294
    %v407 = vpack.c.b16 %v299, %v295
    %v408 = vpack.c.b16 %v300, %v296
    %v409 = vpack.c.b16 %v305, %v301
    %v410 = vpack.c.b16 %v306, %v302
    %v411 = vpack.c.b16 %v307, %v303
    %v412 = vpack.c.b16 %v308, %v304
    %v413 = vpack.c.b16 %v313, %v309
    %v414 = vpack.c.b16 %v314, %v310
    %v415 = vpack.c.b16 %v315, %v311
    %v416 = vpack.c.b16 %v316, %v312
    %v417 = vpack.c.b16 %v321, %v317
    %v418 = vpack.c.b16 %v322, %v318
    %v419 = vpack.c.b16 %v323, %v319
    %v420 = vpack.c.b16 %v324, %v320
    %v421 = vpack.c.b16 %v329, %v325
    %v422 = vpack.c.b16 %v330, %v326
    %v423 = vpack.c.b16 %v331, %v327
    %v424 = vpack.c.b16 %v332, %v328
    %v425 = vpack.c.b16 %v337, %v333
    %v426 = vpack.c.b16 %v338, %v334
    %v427 = vpack.c.b16 %v339, %v335
    %v428 = vpack.c.b16 %v340, %v336
    %v429 = vpack.c.b16 %v345, %v341
    %v430 = vpack.c.b16 %v346, %v342
    %v431 = vpack.c.b16 %v347, %v343
    %v432 = vpack.c.b16 %v348, %v344
    %v433 = vpack.c.b16 %v353, %v349
    %v434 = vpack.c.b16 %v354, %v350
    %v435 = vpack.c.b16 %v355, %v351
    %v436 = vpack.c.b16 %v356, %v352
    %v437 = vpack.c.b16 %v361, %v357
    %v438 = vpack.c.b16 %v362, %v358
    %v439 = vpack.c.b16 %v363, %v359
    %v440 = vpack.c.b16 %v364, %v360
    %v441 = vpack.c.b16 %v369, %v365
    %v442 = vpack.c.b16 %v370, %v366
    %v443 = vpack.c.b16 %v371, %v367
    %v444 = vpack.c.b16 %v372, %v368
    %v445 = vpack.c.b16 %v377, %v373
    %v446 = vpack.c.b16 %v378, %v374
    %v447 = vpack.c.b16 %v379, %v375
    %v448 = vpack.c.b16 %v380, %v376
    %v449 = vpack.c.b16 %v385, %v381
    %v450 = vpack.c.b16 %v386, %v382
    %v451 = vpack.c.b16 %v387, %v383
    %v452 = vpack.c.b16 %v388, %v384
    %517 = vmatprep.subr.bf16.mxu0 %v418
    %518 = vmatpush1.bf16.msra.mxu0 %v417
    %519 = vmatprep.subr.bf16.mxu0 %v414
    %520 = vmatpush1.bf16.msra.mxu0 %v413
    %521 = vmatprep.subr.bf16.mxu0 %v410
    %522 = vmatpush1.bf16.msra.mxu0 %v409
    %523 = vmatprep.subr.bf16.mxu0 %v406
    %524 = vmatpush1.bf16.msra.mxu0 %v405
    %525 = vmatprep.subr.bf16.mxu0 %v402
    %526 = vmatpush1.bf16.msra.mxu0 %v401
    %527 = vmatprep.subr.bf16.mxu0 %v398
    %528 = vmatpush1.bf16.msra.mxu0 %v397
    %529 = vmatprep.subr.bf16.mxu0 %v394
    %530 = vmatpush1.bf16.msra.mxu0 %v393
    %531 = vmatprep.subr.bf16.mxu0 %v390
    %532 = vmatpush1.bf16.msra.mxu0 %v389
    %533 = vmatprep.subr.bf16.mxu0 %v450
    %534 = vmatpush2.bf16.msra.mxu0 %v449
    %535 = vmatprep.subr.bf16.mxu0 %v446
    %536 = vmatpush2.bf16.msra.mxu0 %v445
    %537 = vmatprep.subr.bf16.mxu0 %v442
    %538 = vmatpush2.bf16.msra.mxu0 %v441
    %539 = vmatprep.subr.bf16.mxu0 %v438
    %540 = vmatpush2.bf16.msra.mxu0 %v437
    %541 = vmatprep.subr.bf16.mxu0 %v434
    %542 = vmatpush2.bf16.msra.mxu0 %v433
    %543 = vmatprep.subr.bf16.mxu0 %v430
    %544 = vmatpush2.bf16.msra.mxu0 %v429
    %545 = vmatprep.subr.bf16.mxu0 %v426
    %546 = vmatpush2.bf16.msra.mxu0 %v425
    %547 = vmatprep.subr.bf16.mxu0 %v422
    %548 = vmatpush2.bf16.msra.mxu0 %v421
    %549 = vmatprep.mubr.bf16.mxu0 %v194
    %550 = vmatmul.mubr.bf16.gmra.mxu0 %v193
    %v551 = vpop.f32.mrf.mxu0
    %v552 = vadd.f32 0.0, %v551
    %v553 = vpop.f32.mrf.mxu0
    %v554 = vadd.f32 0.0, %v553
    %v555 = vpop.f32.mrf.mxu0
    %v556 = vpop.f32.mrf.mxu0
    %557 = vdwg.mxu0
    %558 = vmatprep.subr.bf16.mxu0 %v420
    %559 = vmatpush1.bf16.msra.mxu0 %v419
    %560 = vmatprep.subr.bf16.mxu0 %v416
    %561 = vmatpush1.bf16.msra.mxu0 %v415
    %562 = vmatprep.subr.bf16.mxu0 %v412
    %563 = vmatpush1.bf16.msra.mxu0 %v411
    %564 = vmatprep.subr.bf16.mxu0 %v408
    %565 = vmatpush1.bf16.msra.mxu0 %v407
    %566 = vmatprep.subr.bf16.mxu0 %v404
    %567 = vmatpush1.bf16.msra.mxu0 %v403
    %568 = vmatprep.subr.bf16.mxu0 %v400
    %569 = vmatpush1.bf16.msra.mxu0 %v399
    %570 = vmatprep.subr.bf16.mxu0 %v396
    %571 = vmatpush1.bf16.msra.mxu0 %v395
    %572 = vmatprep.subr.bf16.mxu0 %v392
    %573 = vmatpush1.bf16.msra.mxu0 %v391
    %574 = vmatprep.subr.bf16.mxu0 %v452
    %575 = vmatpush2.bf16.msra.mxu0 %v451
    %576 = vmatprep.subr.bf16.mxu0 %v448
    %577 = vmatpush2.bf16.msra.mxu0 %v447
    %578 = vmatprep.subr.bf16.mxu0 %v444
    %579 = vmatpush2.bf16.msra.mxu0 %v443
    %580 = vmatprep.subr.bf16.mxu0 %v440
    %581 = vmatpush2.bf16.msra.mxu0 %v439
    %582 = vmatprep.subr.bf16.mxu0 %v436
    %583 = vmatpush2.bf16.msra.mxu0 %v435
    %584 = vmatprep.subr.bf16.mxu0 %v432
    %585 = vmatpush2.bf16.msra.mxu0 %v431
    %586 = vmatprep.subr.bf16.mxu0 %v428
    %587 = vmatpush2.bf16.msra.mxu0 %v427
    %588 = vmatprep.subr.bf16.mxu0 %v424
    %589 = vmatpush2.bf16.msra.mxu0 %v423
    %590 = vmatprep.mubr.bf16.mxu0 %v194
    %591 = vmatmul.mubr.bf16.gmra.mxu0 %v193
    %v592 = vpop.f32.mrf.mxu0
    %v593 = vadd.f32 0.0, %v592
    %v594 = vpop.f32.mrf.mxu0
    %v595 = vadd.f32 0.0, %v594
    %v596 = vpop.f32.mrf.mxu0
    %v597 = vpop.f32.mrf.mxu0
    %598 = vdwg.mxu0
    %v599 = vadd.f32 %v122, %v552
    %v600 = vadd.f32 %v123, %v554
    %v601 = vadd.f32 %v124, %v593
    %v602 = vadd.f32 %v125, %v595
    %603 = vst [vmem:[#allocation2] sm:$0xff] %v599
    %604 = vst [vmem:[#allocation2 + $0x8] sm:$0xff] %v600
    %605 = vst [vmem:[#allocation2 + $0x10] sm:$0xff] %v601
    %606 = vst [vmem:[#allocation2 + $0x18] sm:$0xff] %v602
    %v607 = vld [vmem:[#allocation3] sm:$0xff]
    %v608 = vld [vmem:[#allocation3 + $0x8] sm:$0xff]
    %v609 = vld [vmem:[#allocation10] sm:$0xff]
    %v610 = vld [vmem:[#allocation10 + $0x8] sm:$0xff]
    %v611 = vld [vmem:[#allocation10 + $0x10] sm:$0xff]
    %v612 = vld [vmem:[#allocation10 + $0x18] sm:$0xff]
    %v613 = vld [vmem:[#allocation10 + $0x20] sm:$0xff]
    %v614 = vld [vmem:[#allocation10 + $0x28] sm:$0xff]
    %v615 = vld [vmem:[#allocation10 + $0x30] sm:$0xff]
    %v616 = vld [vmem:[#allocation10 + $0x38] sm:$0xff]
    %v617 = vld [vmem:[#allocation10 + $0x40] sm:$0xff]
    %v618 = vld [vmem:[#allocation10 + $0x48] sm:$0xff]
    %v619 = vld [vmem:[#allocation10 + $0x50] sm:$0xff]
    %v620 = vld [vmem:[#allocation10 + $0x58] sm:$0xff]
    %v621 = vld [vmem:[#allocation10 + $0x60] sm:$0xff]
    %v622 = vld [vmem:[#allocation10 + $0x68] sm:$0xff]
    %v623 = vld [vmem:[#allocation10 + $0x70] sm:$0xff]
    %v624 = vld [vmem:[#allocation10 + $0x78] sm:$0xff]
    %v625 = vld [vmem:[#allocation10 + $0x80] sm:$0xff]
    %v626 = vld [vmem:[#allocation10 + $0x88] sm:$0xff]
    %v627 = vld [vmem:[#allocation10 + $0x90] sm:$0xff]
    %v628 = vld [vmem:[#allocation10 + $0x98] sm:$0xff]
    %v629 = vld [vmem:[#allocation10 + $0xa0] sm:$0xff]
    %v630 = vld [vmem:[#allocation10 + $0xa8] sm:$0xff]
    %v631 = vld [vmem:[#allocation10 + $0xb0] sm:$0xff]
    %v632 = vld [vmem:[#allocation10 + $0xb8] sm:$0xff]
    %v633 = vld [vmem:[#allocation10 + $0xc0] sm:$0xff]
    %v634 = vld [vmem:[#allocation10 + $0xc8] sm:$0xff]
    %v635 = vld [vmem:[#allocation10 + $0xd0] sm:$0xff]
    %v636 = vld [vmem:[#allocation10 + $0xd8] sm:$0xff]
    %v637 = vld [vmem:[#allocation10 + $0xe0] sm:$0xff]
    %v638 = vld [vmem:[#allocation10 + $0xe8] sm:$0xff]
    %v639 = vld [vmem:[#allocation10 + $0xf0] sm:$0xff]
    %v640 = vld [vmem:[#allocation10 + $0xf8] sm:$0xff]
    %v673 = vunpack.c.l.b16 %v609
    %v674 = vunpack.c.h.b16 %v609
    %v675 = vunpack.c.l.b16 %v610
    %v676 = vunpack.c.h.b16 %v610
    %v677 = vunpack.c.l.b16 %v611
    %v678 = vunpack.c.h.b16 %v611
    %v679 = vunpack.c.l.b16 %v612
    %v680 = vunpack.c.h.b16 %v612
    %v681 = vunpack.c.l.b16 %v613
    %v682 = vunpack.c.h.b16 %v613
    %v683 = vunpack.c.l.b16 %v614
    %v684 = vunpack.c.h.b16 %v614
    %v685 = vunpack.c.l.b16 %v615
    %v686 = vunpack.c.h.b16 %v615
    %v687 = vunpack.c.l.b16 %v616
    %v688 = vunpack.c.h.b16 %v616
    %v689 = vunpack.c.l.b16 %v617
    %v690 = vunpack.c.h.b16 %v617
    %v691 = vunpack.c.l.b16 %v618
    %v692 = vunpack.c.h.b16 %v618
    %v693 = vunpack.c.l.b16 %v619
    %v694 = vunpack.c.h.b16 %v619
    %v695 = vunpack.c.l.b16 %v620
    %v696 = vunpack.c.h.b16 %v620
    %v697 = vunpack.c.l.b16 %v621
    %v698 = vunpack.c.h.b16 %v621
    %v699 = vunpack.c.l.b16 %v622
    %v700 = vunpack.c.h.b16 %v622
    %v701 = vunpack.c.l.b16 %v623
    %v702 = vunpack.c.h.b16 %v623
    %v703 = vunpack.c.l.b16 %v624
    %v704 = vunpack.c.h.b16 %v624
    %v705 = vunpack.c.l.b16 %v625
    %v706 = vunpack.c.h.b16 %v625
    %v707 = vunpack.c.l.b16 %v626
    %v708 = vunpack.c.h.b16 %v626
    %v709 = vunpack.c.l.b16 %v627
    %v710 = vunpack.c.h.b16 %v627
    %v711 = vunpack.c.l.b16 %v628
    %v712 = vunpack.c.h.b16 %v628
    %v713 = vunpack.c.l.b16 %v629
    %v714 = vunpack.c.h.b16 %v629
    %v715 = vunpack.c.l.b16 %v630
    %v716 = vunpack.c.h.b16 %v630
    %v717 = vunpack.c.l.b16 %v631
    %v718 = vunpack.c.h.b16 %v631
    %v719 = vunpack.c.l.b16 %v632
    %v720 = vunpack.c.h.b16 %v632
    %v721 = vunpack.c.l.b16 %v633
    %v722 = vunpack.c.h.b16 %v633
    %v723 = vunpack.c.l.b16 %v634
    %v724 = vunpack.c.h.b16 %v634
    %v725 = vunpack.c.l.b16 %v635
    %v726 = vunpack.c.h.b16 %v635
    %v727 = vunpack.c.l.b16 %v636
    %v728 = vunpack.c.h.b16 %v636
    %v729 = vunpack.c.l.b16 %v637
    %v730 = vunpack.c.h.b16 %v637
    %v731 = vunpack.c.l.b16 %v638
    %v732 = vunpack.c.h.b16 %v638
    %v733 = vunpack.c.l.b16 %v639
    %v734 = vunpack.c.h.b16 %v639
    %v735 = vunpack.c.l.b16 %v640
    %v736 = vunpack.c.h.b16 %v640
    %v737 = vpack.c.b16 %v675, %v673
    %v738 = vpack.c.b16 %v676, %v674
    %v739 = vpack.c.b16 %v679, %v677
    %v740 = vpack.c.b16 %v680, %v678
    %v741 = vpack.c.b16 %v683, %v681
    %v742 = vpack.c.b16 %v684, %v682
    %v743 = vpack.c.b16 %v687, %v685
    %v744 = vpack.c.b16 %v688, %v686
    %v745 = vpack.c.b16 %v691, %v689
    %v746 = vpack.c.b16 %v692, %v690
    %v747 = vpack.c.b16 %v695, %v693
    %v748 = vpack.c.b16 %v696, %v694
    %v749 = vpack.c.b16 %v699, %v697
    %v750 = vpack.c.b16 %v700, %v698
    %v751 = vpack.c.b16 %v703, %v701
    %v752 = vpack.c.b16 %v704, %v702
    %v753 = vpack.c.b16 %v707, %v705
    %v754 = vpack.c.b16 %v708, %v706
    %v755 = vpack.c.b16 %v711, %v709
    %v756 = vpack.c.b16 %v712, %v710
    %v757 = vpack.c.b16 %v715, %v713
    %v758 = vpack.c.b16 %v716, %v714
    %v759 = vpack.c.b16 %v719, %v717
    %v760 = vpack.c.b16 %v720, %v718
    %v761 = vpack.c.b16 %v723, %v721
    %v762 = vpack.c.b16 %v724, %v722
    %v763 = vpack.c.b16 %v727, %v725
    %v764 = vpack.c.b16 %v728, %v726
    %v765 = vpack.c.b16 %v731, %v729
    %v766 = vpack.c.b16 %v732, %v730
    %v767 = vpack.c.b16 %v735, %v733
    %v768 = vpack.c.b16 %v736, %v734
    %801 = vmatprep.subr.bf16.mxu0 %v752
    %802 = vmatpush1.bf16.msra.mxu0 %v751
    %803 = vmatprep.subr.bf16.mxu0 %v750
    %804 = vmatpush1.bf16.msra.mxu0 %v749
    %805 = vmatprep.subr.bf16.mxu0 %v748
    %806 = vmatpush1.bf16.msra.mxu0 %v747
    %807 = vmatprep.subr.bf16.mxu0 %v746
    %808 = vmatpush1.bf16.msra.mxu0 %v745
    %809 = vmatprep.subr.bf16.mxu0 %v744
    %810 = vmatpush1.bf16.msra.mxu0 %v743
    %811 = vmatprep.subr.bf16.mxu0 %v742
    %812 = vmatpush1.bf16.msra.mxu0 %v741
    %813 = vmatprep.subr.bf16.mxu0 %v740
    %814 = vmatpush1.bf16.msra.mxu0 %v739
    %815 = vmatprep.subr.bf16.mxu0 %v738
    %816 = vmatpush1.bf16.msra.mxu0 %v737
    %817 = vmatprep.subr.bf16.mxu0 %v768
    %818 = vmatpush2.bf16.msra.mxu0 %v767
    %819 = vmatprep.subr.bf16.mxu0 %v766
    %820 = vmatpush2.bf16.msra.mxu0 %v765
    %821 = vmatprep.subr.bf16.mxu0 %v764
    %822 = vmatpush2.bf16.msra.mxu0 %v763
    %823 = vmatprep.subr.bf16.mxu0 %v762
    %824 = vmatpush2.bf16.msra.mxu0 %v761
    %825 = vmatprep.subr.bf16.mxu0 %v760
    %826 = vmatpush2.bf16.msra.mxu0 %v759
    %827 = vmatprep.subr.bf16.mxu0 %v758
    %828 = vmatpush2.bf16.msra.mxu0 %v757
    %829 = vmatprep.subr.bf16.mxu0 %v756
    %830 = vmatpush2.bf16.msra.mxu0 %v755
    %831 = vmatprep.subr.bf16.mxu0 %v754
    %832 = vmatpush2.bf16.msra.mxu0 %v753
    %833 = vmatprep.mubr.bf16.mxu0 %v194
    %834 = vmatmul.mubr.bf16.gmra.mxu0 %v193
    %v835 = vpop.f32.mrf.mxu0
    %v836 = vadd.f32 0.0, %v835
    %v837 = vpop.f32.mrf.mxu0
    %v838 = vadd.f32 0.0, %v837
    %v839 = vpop.f32.mrf.mxu0
    %v840 = vpop.f32.mrf.mxu0
    %841 = vdwg.mxu0
    %v842 = vadd.f32 %v607, %v836
    %v843 = vadd.f32 %v608, %v838
    %844 = vst [vmem:[#allocation3] sm:$0xff] %v842
    %845 = vst [vmem:[#allocation3 + $0x8] sm:$0xff] %v843
    %v846 = vld [vmem:[#allocation4] sm:$0xff]
    %v847 = vld [vmem:[#allocation4 + $0x8] sm:$0xff]
    %v848 = vld [vmem:[#allocation11] sm:$0xff]
    %v849 = vld [vmem:[#allocation11 + $0x8] sm:$0xff]
    %v850 = vld [vmem:[#allocation11 + $0x10] sm:$0xff]
    %v851 = vld [vmem:[#allocation11 + $0x18] sm:$0xff]
    %v852 = vld [vmem:[#allocation11 + $0x20] sm:$0xff]
    %v853 = vld [vmem:[#allocation11 + $0x28] sm:$0xff]
    %v854 = vld [vmem:[#allocation11 + $0x30] sm:$0xff]
    %v855 = vld [vmem:[#allocation11 + $0x38] sm:$0xff]
    %v856 = vld [vmem:[#allocation11 + $0x40] sm:$0xff]
    %v857 = vld [vmem:[#allocation11 + $0x48] sm:$0xff]
    %v858 = vld [vmem:[#allocation11 + $0x50] sm:$0xff]
    %v859 = vld [vmem:[#allocation11 + $0x58] sm:$0xff]
    %v860 = vld [vmem:[#allocation11 + $0x60] sm:$0xff]
    %v861 = vld [vmem:[#allocation11 + $0x68] sm:$0xff]
    %v862 = vld [vmem:[#allocation11 + $0x70] sm:$0xff]
    %v863 = vld [vmem:[#allocation11 + $0x78] sm:$0xff]
    %v864 = vld [vmem:[#allocation11 + $0x80] sm:$0xff]
    %v865 = vld [vmem:[#allocation11 + $0x88] sm:$0xff]
    %v866 = vld [vmem:[#allocation11 + $0x90] sm:$0xff]
    %v867 = vld [vmem:[#allocation11 + $0x98] sm:$0xff]
    %v868 = vld [vmem:[#allocation11 + $0xa0] sm:$0xff]
    %v869 = vld [vmem:[#allocation11 + $0xa8] sm:$0xff]
    %v870 = vld [vmem:[#allocation11 + $0xb0] sm:$0xff]
    %v871 = vld [vmem:[#allocation11 + $0xb8] sm:$0xff]
    %v872 = vld [vmem:[#allocation11 + $0xc0] sm:$0xff]
    %v873 = vld [vmem:[#allocation11 + $0xc8] sm:$0xff]
    %v874 = vld [vmem:[#allocation11 + $0xd0] sm:$0xff]
    %v875 = vld [vmem:[#allocation11 + $0xd8] sm:$0xff]
    %v876 = vld [vmem:[#allocation11 + $0xe0] sm:$0xff]
    %v877 = vld [vmem:[#allocation11 + $0xe8] sm:$0xff]
    %v878 = vld [vmem:[#allocation11 + $0xf0] sm:$0xff]
    %v879 = vld [vmem:[#allocation11 + $0xf8] sm:$0xff]
    %v912 = vunpack.c.l.b16 %v848
    %v913 = vunpack.c.h.b16 %v848
    %v914 = vunpack.c.l.b16 %v849
    %v915 = vunpack.c.h.b16 %v849
    %v916 = vunpack.c.l.b16 %v850
    %v917 = vunpack.c.h.b16 %v850
    %v918 = vunpack.c.l.b16 %v851
    %v919 = vunpack.c.h.b16 %v851
    %v920 = vunpack.c.l.b16 %v852
    %v921 = vunpack.c.h.b16 %v852
    %v922 = vunpack.c.l.b16 %v853
    %v923 = vunpack.c.h.b16 %v853
    %v924 = vunpack.c.l.b16 %v854
    %v925 = vunpack.c.h.b16 %v854
    %v926 = vunpack.c.l.b16 %v855
    %v927 = vunpack.c.h.b16 %v855
    %v928 = vunpack.c.l.b16 %v856
    %v929 = vunpack.c.h.b16 %v856
    %v930 = vunpack.c.l.b16 %v857
    %v931 = vunpack.c.h.b16 %v857
    %v932 = vunpack.c.l.b16 %v858
    %v933 = vunpack.c.h.b16 %v858
    %v934 = vunpack.c.l.b16 %v859
    %v935 = vunpack.c.h.b16 %v859
    %v936 = vunpack.c.l.b16 %v860
    %v937 = vunpack.c.h.b16 %v860
    %v938 = vunpack.c.l.b16 %v861
    %v939 = vunpack.c.h.b16 %v861
    %v940 = vunpack.c.l.b16 %v862
    %v941 = vunpack.c.h.b16 %v862
    %v942 = vunpack.c.l.b16 %v863
    %v943 = vunpack.c.h.b16 %v863
    %v944 = vunpack.c.l.b16 %v864
    %v945 = vunpack.c.h.b16 %v864
    %v946 = vunpack.c.l.b16 %v865
    %v947 = vunpack.c.h.b16 %v865
    %v948 = vunpack.c.l.b16 %v866
    %v949 = vunpack.c.h.b16 %v866
    %v950 = vunpack.c.l.b16 %v867
    %v951 = vunpack.c.h.b16 %v867
    %v952 = vunpack.c.l.b16 %v868
    %v953 = vunpack.c.h.b16 %v868
    %v954 = vunpack.c.l.b16 %v869
    %v955 = vunpack.c.h.b16 %v869
    %v956 = vunpack.c.l.b16 %v870
    %v957 = vunpack.c.h.b16 %v870
    %v958 = vunpack.c.l.b16 %v871
    %v959 = vunpack.c.h.b16 %v871
    %v960 = vunpack.c.l.b16 %v872
    %v961 = vunpack.c.h.b16 %v872
    %v962 = vunpack.c.l.b16 %v873
    %v963 = vunpack.c.h.b16 %v873
    %v964 = vunpack.c.l.b16 %v874
    %v965 = vunpack.c.h.b16 %v874
    %v966 = vunpack.c.l.b16 %v875
    %v967 = vunpack.c.h.b16 %v875
    %v968 = vunpack.c.l.b16 %v876
    %v969 = vunpack.c.h.b16 %v876
    %v970 = vunpack.c.l.b16 %v877
    %v971 = vunpack.c.h.b16 %v877
    %v972 = vunpack.c.l.b16 %v878
    %v973 = vunpack.c.h.b16 %v878
    %v974 = vunpack.c.l.b16 %v879
    %v975 = vunpack.c.h.b16 %v879
    %v976 = vpack.c.b16 %v914, %v912
    %v977 = vpack.c.b16 %v915, %v913
    %v978 = vpack.c.b16 %v918, %v916
    %v979 = vpack.c.b16 %v919, %v917
    %v980 = vpack.c.b16 %v922, %v920
    %v981 = vpack.c.b16 %v923, %v921
    %v982 = vpack.c.b16 %v926, %v924
    %v983 = vpack.c.b16 %v927, %v925
    %v984 = vpack.c.b16 %v930, %v928
    %v985 = vpack.c.b16 %v931, %v929
    %v986 = vpack.c.b16 %v934, %v932
    %v987 = vpack.c.b16 %v935, %v933
    %v988 = vpack.c.b16 %v938, %v936
    %v989 = vpack.c.b16 %v939, %v937
    %v990 = vpack.c.b16 %v942, %v940
    %v991 = vpack.c.b16 %v943, %v941
    %v992 = vpack.c.b16 %v946, %v944
    %v993 = vpack.c.b16 %v947, %v945
    %v994 = vpack.c.b16 %v950, %v948
    %v995 = vpack.c.b16 %v951, %v949
    %v996 = vpack.c.b16 %v954, %v952
    %v997 = vpack.c.b16 %v955, %v953
    %v998 = vpack.c.b16 %v958, %v956
    %v999 = vpack.c.b16 %v959, %v957
    %v1000 = vpack.c.b16 %v962, %v960
    %v1001 = vpack.c.b16 %v963, %v961
    %v1002 = vpack.c.b16 %v966, %v964
    %v1003 = vpack.c.b16 %v967, %v965
    %v1004 = vpack.c.b16 %v970, %v968
    %v1005 = vpack.c.b16 %v971, %v969
    %v1006 = vpack.c.b16 %v974, %v972
    %v1007 = vpack.c.b16 %v975, %v973
    %1040 = vmatprep.subr.bf16.mxu0 %v991
    %1041 = vmatpush1.bf16.msra.mxu0 %v990
    %1042 = vmatprep.subr.bf16.mxu0 %v989
    %1043 = vmatpush1.bf16.msra.mxu0 %v988
    %1044 = vmatprep.subr.bf16.mxu0 %v987
    %1045 = vmatpush1.bf16.msra.mxu0 %v986
    %1046 = vmatprep.subr.bf16.mxu0 %v985
    %1047 = vmatpush1.bf16.msra.mxu0 %v984
    %1048 = vmatprep.subr.bf16.mxu0 %v983
    %1049 = vmatpush1.bf16.msra.mxu0 %v982
    %1050 = vmatprep.subr.bf16.mxu0 %v981
    %1051 = vmatpush1.bf16.msra.mxu0 %v980
    %1052 = vmatprep.subr.bf16.mxu0 %v979
    %1053 = vmatpush1.bf16.msra.mxu0 %v978
    %1054 = vmatprep.subr.bf16.mxu0 %v977
    %1055 = vmatpush1.bf16.msra.mxu0 %v976
    %1056 = vmatprep.subr.bf16.mxu0 %v1007
    %1057 = vmatpush2.bf16.msra.mxu0 %v1006
    %1058 = vmatprep.subr.bf16.mxu0 %v1005
    %1059 = vmatpush2.bf16.msra.mxu0 %v1004
    %1060 = vmatprep.subr.bf16.mxu0 %v1003
    %1061 = vmatpush2.bf16.msra.mxu0 %v1002
    %1062 = vmatprep.subr.bf16.mxu0 %v1001
    %1063 = vmatpush2.bf16.msra.mxu0 %v1000
    %1064 = vmatprep.subr.bf16.mxu0 %v999
    %1065 = vmatpush2.bf16.msra.mxu0 %v998
    %1066 = vmatprep.subr.bf16.mxu0 %v997
    %1067 = vmatpush2.bf16.msra.mxu0 %v996
    %1068 = vmatprep.subr.bf16.mxu0 %v995
    %1069 = vmatpush2.bf16.msra.mxu0 %v994
    %1070 = vmatprep.subr.bf16.mxu0 %v993
    %1071 = vmatpush2.bf16.msra.mxu0 %v992
    %1072 = vmatprep.mubr.bf16.mxu0 %v194
    %1073 = vmatmul.mubr.bf16.gmra.mxu0 %v193
    %v1074 = vpop.f32.mrf.mxu0
    %v1075 = vadd.f32 0.0, %v1074
    %v1076 = vpop.f32.mrf.mxu0
    %v1077 = vadd.f32 0.0, %v1076
    %v1078 = vpop.f32.mrf.mxu0
    %v1079 = vpop.f32.mrf.mxu0
    %1080 = vdwg.mxu0
    %v1081 = vadd.f32 %v846, %v1075
    %v1082 = vadd.f32 %v847, %v1077
    %1083 = vst [vmem:[#allocation4] sm:$0xff] %v1081
    %1084 = vst [vmem:[#allocation4 + $0x8] sm:$0xff] %v1082
    // Predicated region
    $region58: #{tpu_custom_call.1} parent=1 // pred_check
      %p1085 = pneg %p109
    $region59: #{tpu_custom_call.1} parent=1 // pred_check_branch
      %1087 = sbr.rel (%p1085) target = $region61
    $region60: #{tpu_custom_call.1} parent=1 // pred_region
      %v1088 = vld [vmem:[#allocation13] sm:$0xff]
      %v1089 = vld [vmem:[%s5] sm:$0xff]
      %v1090 = vld [vmem:[#allocation14] sm:$0xff]
      %v1091 = vld [vmem:[#allocation14 + $0x8] sm:$0xff]
      %v1092 = vld [vmem:[#allocation14 + $0x10] sm:$0xff]
      %v1093 = vld [vmem:[#allocation14 + $0x18] sm:$0xff]
      %v1094 = vld [vmem:[#allocation14 + $0x20] sm:$0xff]
      %v1095 = vld [vmem:[#allocation14 + $0x28] sm:$0xff]
      %v1096 = vld [vmem:[#allocation14 + $0x30] sm:$0xff]
      %v1097 = vld [vmem:[#allocation14 + $0x38] sm:$0xff]
      %v1098 = vld [vmem:[#allocation14 + $0x40] sm:$0xff]
      %v1099 = vld [vmem:[#allocation14 + $0x48] sm:$0xff]
      %v1100 = vld [vmem:[#allocation14 + $0x50] sm:$0xff]
      %v1101 = vld [vmem:[#allocation14 + $0x58] sm:$0xff]
      %v1102 = vld [vmem:[#allocation14 + $0x60] sm:$0xff]
      %v1103 = vld [vmem:[#allocation14 + $0x68] sm:$0xff]
      %v1104 = vld [vmem:[#allocation14 + $0x70] sm:$0xff]
      %v1105 = vld [vmem:[#allocation14 + $0x78] sm:$0xff]
      %v1106 = vmul.f32 %v1088, 0.088388346
      %v1107 = vmul.f32 %v1089, 0.088388346
      %v1108 = vld [vmem:[#allocation2] sm:$0xff]
      %1109 = vmatprep.subr.mxu0 0.0
      %1110 = vmatpush1.msra.mxu0 %v1105
      %1111 = vmatprep.subr.mxu0 0.0
      %1112 = vmatpush1.msra.mxu0 %v1104
      %1113 = vmatprep.subr.mxu0 0.0
      %1114 = vmatpush1.msra.mxu0 %v1103
      %1115 = vmatprep.subr.mxu0 0.0
      %1116 = vmatpush1.msra.mxu0 %v1102
      %1117 = vmatprep.subr.mxu0 0.0
      %1118 = vmatpush1.msra.mxu0 %v1101
      %1119 = vmatprep.subr.mxu0 0.0
      %1120 = vmatpush1.msra.mxu0 %v1100
      %1121 = vmatprep.subr.mxu0 0.0
      %1122 = vmatpush1.msra.mxu0 %v1099
      %1123 = vmatprep.subr.mxu0 0.0
      %1124 = vmatpush1.msra.mxu0 %v1098
      %1125 = vmatprep.subr.mxu0 0.0
      %1126 = vmatpush1.msra.mxu0 %v1097
      %1127 = vmatprep.subr.mxu0 0.0
      %1128 = vmatpush1.msra.mxu0 %v1096
      %1129 = vmatprep.subr.mxu0 0.0
      %1130 = vmatpush1.msra.mxu0 %v1095
      %1131 = vmatprep.subr.mxu0 0.0
      %1132 = vmatpush1.msra.mxu0 %v1094
      %1133 = vmatprep.subr.mxu0 0.0
      %1134 = vmatpush1.msra.mxu0 %v1093
      %1135 = vmatprep.subr.mxu0 0.0
      %1136 = vmatpush1.msra.mxu0 %v1092
      %1137 = vmatprep.subr.mxu0 0.0
      %1138 = vmatpush1.msra.mxu0 %v1091
      %1139 = vmatprep.subr.mxu0 0.0
      %1140 = vmatpush1.msra.mxu0 %v1090
      %1141 = vmatprep.subr.mxu0 0.0
      %1142 = vmatpush2.msra.mxu0 0.0
      %1143 = vmatprep.subr.mxu0 0.0
      %1144 = vmatpush2.msra.mxu0 0.0
      %1145 = vmatprep.subr.mxu0 0.0
      %1146 = vmatpush2.msra.mxu0 0.0
      %1147 = vmatprep.subr.mxu0 0.0
      %1148 = vmatpush2.msra.mxu0 0.0
      %1149 = vmatprep.subr.mxu0 0.0
      %1150 = vmatpush2.msra.mxu0 0.0
      %1151 = vmatprep.subr.mxu0 0.0
      %1152 = vmatpush2.msra.mxu0 0.0
      %1153 = vmatprep.subr.mxu0 0.0
      %1154 = vmatpush2.msra.mxu0 0.0
      %1155 = vmatprep.subr.mxu0 0.0
      %1156 = vmatpush2.msra.mxu0 0.0
      %1157 = vmatprep.subr.mxu0 0.0
      %1158 = vmatpush2.msra.mxu0 0.0
      %1159 = vmatprep.subr.mxu0 0.0
      %1160 = vmatpush2.msra.mxu0 0.0
      %1161 = vmatprep.subr.mxu0 0.0
      %1162 = vmatpush2.msra.mxu0 0.0
      %1163 = vmatprep.subr.mxu0 0.0
      %1164 = vmatpush2.msra.mxu0 0.0
      %1165 = vmatprep.subr.mxu0 0.0
      %1166 = vmatpush2.msra.mxu0 0.0
      %1167 = vmatprep.subr.mxu0 0.0
      %1168 = vmatpush2.msra.mxu0 0.0
      %1169 = vmatprep.subr.mxu0 0.0
      %1170 = vmatpush2.msra.mxu0 0.0
      %1171 = vmatprep.subr.mxu0 0.0
      %1172 = vmatpush2.msra.mxu0 0.0
      %1173 = vmatprep.mubr.f32.mxu0 0.0
      %1174 = vmatmul.mubr.f32.gmra.mxu0 %v1108
      %v1175 = vpop.f32.mrf.mxu0
      %v1176 = vadd.f32 0.0, %v1175
      %v1177 = vpop.f32.mrf.mxu0
      %1178 = vdwg.mxu0
      %v1179 = vmul.f32 %v1108, %v1106
      %v1180 = vmul.f32 %v1176, %v1107
      %v1181 = vadd.f32 %v1179, %v1180
      %v1182 = vpack.c.bf16 %v1181, %v1181
      %1183 = vst [vmem:[#allocation16] sm:$0xf] %v1182
      %v1184 = vld [vmem:[#allocation2 + $0x8] sm:$0xff]
      %1185 = vmatprep.subr.mxu0 0.0
      %1186 = vmatpush1.msra.mxu0 %v1105
      %1187 = vmatprep.subr.mxu0 0.0
      %1188 = vmatpush1.msra.mxu0 %v1104
      %1189 = vmatprep.subr.mxu0 0.0
      %1190 = vmatpush1.msra.mxu0 %v1103
      %1191 = vmatprep.subr.mxu0 0.0
      %1192 = vmatpush1.msra.mxu0 %v1102
      %1193 = vmatprep.subr.mxu0 0.0
      %1194 = vmatpush1.msra.mxu0 %v1101
      %1195 = vmatprep.subr.mxu0 0.0
      %1196 = vmatpush1.msra.mxu0 %v1100
      %1197 = vmatprep.subr.mxu0 0.0
      %1198 = vmatpush1.msra.mxu0 %v1099
      %1199 = vmatprep.subr.mxu0 0.0
      %1200 = vmatpush1.msra.mxu0 %v1098
      %1201 = vmatprep.subr.mxu0 0.0
      %1202 = vmatpush1.msra.mxu0 %v1097
      %1203 = vmatprep.subr.mxu0 0.0
      %1204 = vmatpush1.msra.mxu0 %v1096
      %1205 = vmatprep.subr.mxu0 0.0
      %1206 = vmatpush1.msra.mxu0 %v1095
      %1207 = vmatprep.subr.mxu0 0.0
      %1208 = vmatpush1.msra.mxu0 %v1094
      %1209 = vmatprep.subr.mxu0 0.0
      %1210 = vmatpush1.msra.mxu0 %v1093
      %1211 = vmatprep.subr.mxu0 0.0
      %1212 = vmatpush1.msra.mxu0 %v1092
      %1213 = vmatprep.subr.mxu0 0.0
      %1214 = vmatpush1.msra.mxu0 %v1091
      %1215 = vmatprep.subr.mxu0 0.0
      %1216 = vmatpush1.msra.mxu0 %v1090
      %1217 = vmatprep.subr.mxu0 0.0
      %1218 = vmatpush2.msra.mxu0 0.0
      %1219 = vmatprep.subr.mxu0 0.0
      %1220 = vmatpush2.msra.mxu0 0.0
      %1221 = vmatprep.subr.mxu0 0.0
      %1222 = vmatpush2.msra.mxu0 0.0
      %1223 = vmatprep.subr.mxu0 0.0
      %1224 = vmatpush2.msra.mxu0 0.0
      %1225 = vmatprep.subr.mxu0 0.0
      %1226 = vmatpush2.msra.mxu0 0.0
      %1227 = vmatprep.subr.mxu0 0.0
      %1228 = vmatpush2.msra.mxu0 0.0
      %1229 = vmatprep.subr.mxu0 0.0
      %1230 = vmatpush2.msra.mxu0 0.0
      %1231 = vmatprep.subr.mxu0 0.0
      %1232 = vmatpush2.msra.mxu0 0.0
      %1233 = vmatprep.subr.mxu0 0.0
      %1234 = vmatpush2.msra.mxu0 0.0
      %1235 = vmatprep.subr.mxu0 0.0
      %1236 = vmatpush2.msra.mxu0 0.0
      %1237 = vmatprep.subr.mxu0 0.0
      %1238 = vmatpush2.msra.mxu0 0.0
      %1239 = vmatprep.subr.mxu0 0.0
      %1240 = vmatpush2.msra.mxu0 0.0
      %1241 = vmatprep.subr.mxu0 0.0
      %1242 = vmatpush2.msra.mxu0 0.0
      %1243 = vmatprep.subr.mxu0 0.0
      %1244 = vmatpush2.msra.mxu0 0.0
      %1245 = vmatprep.subr.mxu0 0.0
      %1246 = vmatpush2.msra.mxu0 0.0
      %1247 = vmatprep.subr.mxu0 0.0
      %1248 = vmatpush2.msra.mxu0 0.0
      %1249 = vmatprep.mubr.f32.mxu0 0.0
      %1250 = vmatmul.mubr.f32.gmra.mxu0 %v1184
      %v1251 = vpop.f32.mrf.mxu0
      %v1252 = vadd.f32 0.0, %v1251
      %v1253 = vpop.f32.mrf.mxu0
      %1254 = vdwg.mxu0
      %v1255 = vmul.f32 %v1184, %v1106
      %v1256 = vmul.f32 %v1252, %v1107
      %v1257 = vadd.f32 %v1255, %v1256
      %v1258 = vpack.c.bf16 %v1257, %v1257
      %1259 = vst [vmem:[#allocation16 + $0x4] sm:$0xf] %v1258
      %v1260 = vld [vmem:[#allocation2 + $0x10] sm:$0xff]
      %1261 = vmatprep.subr.mxu0 0.0
      %1262 = vmatpush1.msra.mxu0 %v1105
      %1263 = vmatprep.subr.mxu0 0.0
      %1264 = vmatpush1.msra.mxu0 %v1104
      %1265 = vmatprep.subr.mxu0 0.0
      %1266 = vmatpush1.msra.mxu0 %v1103
      %1267 = vmatprep.subr.mxu0 0.0
      %1268 = vmatpush1.msra.mxu0 %v1102
      %1269 = vmatprep.subr.mxu0 0.0
      %1270 = vmatpush1.msra.mxu0 %v1101
      %1271 = vmatprep.subr.mxu0 0.0
      %1272 = vmatpush1.msra.mxu0 %v1100
      %1273 = vmatprep.subr.mxu0 0.0
      %1274 = vmatpush1.msra.mxu0 %v1099
      %1275 = vmatprep.subr.mxu0 0.0
      %1276 = vmatpush1.msra.mxu0 %v1098
      %1277 = vmatprep.subr.mxu0 0.0
      %1278 = vmatpush1.msra.mxu0 %v1097
      %1279 = vmatprep.subr.mxu0 0.0
      %1280 = vmatpush1.msra.mxu0 %v1096
      %1281 = vmatprep.subr.mxu0 0.0
      %1282 = vmatpush1.msra.mxu0 %v1095
      %1283 = vmatprep.subr.mxu0 0.0
      %1284 = vmatpush1.msra.mxu0 %v1094
      %1285 = vmatprep.subr.mxu0 0.0
      %1286 = vmatpush1.msra.mxu0 %v1093
      %1287 = vmatprep.subr.mxu0 0.0
      %1288 = vmatpush1.msra.mxu0 %v1092
      %1289 = vmatprep.subr.mxu0 0.0
      %1290 = vmatpush1.msra.mxu0 %v1091
      %1291 = vmatprep.subr.mxu0 0.0
      %1292 = vmatpush1.msra.mxu0 %v1090
      %1293 = vmatprep.subr.mxu0 0.0
      %1294 = vmatpush2.msra.mxu0 0.0
      %1295 = vmatprep.subr.mxu0 0.0
      %1296 = vmatpush2.msra.mxu0 0.0
      %1297 = vmatprep.subr.mxu0 0.0
      %1298 = vmatpush2.msra.mxu0 0.0
      %1299 = vmatprep.subr.mxu0 0.0
      %1300 = vmatpush2.msra.mxu0 0.0
      %1301 = vmatprep.subr.mxu0 0.0
      %1302 = vmatpush2.msra.mxu0 0.0
      %1303 = vmatprep.subr.mxu0 0.0
      %1304 = vmatpush2.msra.mxu0 0.0
      %1305 = vmatprep.subr.mxu0 0.0
      %1306 = vmatpush2.msra.mxu0 0.0
      %1307 = vmatprep.subr.mxu0 0.0
      %1308 = vmatpush2.msra.mxu0 0.0
      %1309 = vmatprep.subr.mxu0 0.0
      %1310 = vmatpush2.msra.mxu0 0.0
      %1311 = vmatprep.subr.mxu0 0.0
      %1312 = vmatpush2.msra.mxu0 0.0
      %1313 = vmatprep.subr.mxu0 0.0
      %1314 = vmatpush2.msra.mxu0 0.0
      %1315 = vmatprep.subr.mxu0 0.0
      %1316 = vmatpush2.msra.mxu0 0.0
      %1317 = vmatprep.subr.mxu0 0.0
      %1318 = vmatpush2.msra.mxu0 0.0
      %1319 = vmatprep.subr.mxu0 0.0
      %1320 = vmatpush2.msra.mxu0 0.0
      %1321 = vmatprep.subr.mxu0 0.0
      %1322 = vmatpush2.msra.mxu0 0.0
      %1323 = vmatprep.subr.mxu0 0.0
      %1324 = vmatpush2.msra.mxu0 0.0
      %1325 = vmatprep.mubr.f32.mxu0 0.0
      %1326 = vmatmul.mubr.f32.gmra.mxu0 %v1260
      %v1327 = vpop.f32.mrf.mxu0
      %v1328 = vadd.f32 0.0, %v1327
      %v1329 = vpop.f32.mrf.mxu0
      %1330 = vdwg.mxu0
      %v1331 = vmul.f32 %v1260, %v1106
      %v1332 = vmul.f32 %v1328, %v1107
      %v1333 = vadd.f32 %v1331, %v1332
      %v1334 = vpack.c.bf16 %v1333, %v1333
      %1335 = vst [vmem:[#allocation16 + $0x8] sm:$0xf] %v1334
      %v1336 = vld [vmem:[#allocation2 + $0x18] sm:$0xff]
      %1337 = vmatprep.subr.mxu0 0.0
      %1338 = vmatpush1.msra.mxu0 %v1105
      %1339 = vmatprep.subr.mxu0 0.0
      %1340 = vmatpush1.msra.mxu0 %v1104
      %1341 = vmatprep.subr.mxu0 0.0
      %1342 = vmatpush1.msra.mxu0 %v1103
      %1343 = vmatprep.subr.mxu0 0.0
      %1344 = vmatpush1.msra.mxu0 %v1102
      %1345 = vmatprep.subr.mxu0 0.0
      %1346 = vmatpush1.msra.mxu0 %v1101
      %1347 = vmatprep.subr.mxu0 0.0
      %1348 = vmatpush1.msra.mxu0 %v1100
      %1349 = vmatprep.subr.mxu0 0.0
      %1350 = vmatpush1.msra.mxu0 %v1099
      %1351 = vmatprep.subr.mxu0 0.0
      %1352 = vmatpush1.msra.mxu0 %v1098
      %1353 = vmatprep.subr.mxu0 0.0
      %1354 = vmatpush1.msra.mxu0 %v1097
      %1355 = vmatprep.subr.mxu0 0.0
      %1356 = vmatpush1.msra.mxu0 %v1096
      %1357 = vmatprep.subr.mxu0 0.0
      %1358 = vmatpush1.msra.mxu0 %v1095
      %1359 = vmatprep.subr.mxu0 0.0
      %1360 = vmatpush1.msra.mxu0 %v1094
      %1361 = vmatprep.subr.mxu0 0.0
      %1362 = vmatpush1.msra.mxu0 %v1093
      %1363 = vmatprep.subr.mxu0 0.0
      %1364 = vmatpush1.msra.mxu0 %v1092
      %1365 = vmatprep.subr.mxu0 0.0
      %1366 = vmatpush1.msra.mxu0 %v1091
      %1367 = vmatprep.subr.mxu0 0.0
      %1368 = vmatpush1.msra.mxu0 %v1090
      %1369 = vmatprep.subr.mxu0 0.0
      %1370 = vmatpush2.msra.mxu0 0.0
      %1371 = vmatprep.subr.mxu0 0.0
      %1372 = vmatpush2.msra.mxu0 0.0
      %1373 = vmatprep.subr.mxu0 0.0
      %1374 = vmatpush2.msra.mxu0 0.0
      %1375 = vmatprep.subr.mxu0 0.0
      %1376 = vmatpush2.msra.mxu0 0.0
      %1377 = vmatprep.subr.mxu0 0.0
      %1378 = vmatpush2.msra.mxu0 0.0
      %1379 = vmatprep.subr.mxu0 0.0
      %1380 = vmatpush2.msra.mxu0 0.0
      %1381 = vmatprep.subr.mxu0 0.0
      %1382 = vmatpush2.msra.mxu0 0.0
      %1383 = vmatprep.subr.mxu0 0.0
      %1384 = vmatpush2.msra.mxu0 0.0
      %1385 = vmatprep.subr.mxu0 0.0
      %1386 = vmatpush2.msra.mxu0 0.0
      %1387 = vmatprep.subr.mxu0 0.0
      %1388 = vmatpush2.msra.mxu0 0.0
      %1389 = vmatprep.subr.mxu0 0.0
      %1390 = vmatpush2.msra.mxu0 0.0
      %1391 = vmatprep.subr.mxu0 0.0
      %1392 = vmatpush2.msra.mxu0 0.0
      %1393 = vmatprep.subr.mxu0 0.0
      %1394 = vmatpush2.msra.mxu0 0.0
      %1395 = vmatprep.subr.mxu0 0.0
      %1396 = vmatpush2.msra.mxu0 0.0
      %1397 = vmatprep.subr.mxu0 0.0
      %1398 = vmatpush2.msra.mxu0 0.0
      %1399 = vmatprep.subr.mxu0 0.0
      %1400 = vmatpush2.msra.mxu0 0.0
      %1401 = vmatprep.mubr.f32.mxu0 0.0
      %1402 = vmatmul.mubr.f32.gmra.mxu0 %v1336
      %v1403 = vpop.f32.mrf.mxu0
      %v1404 = vadd.f32 0.0, %v1403
      %v1405 = vpop.f32.mrf.mxu0
      %1406 = vdwg.mxu0
      %v1407 = vmul.f32 %v1336, %v1106
      %v1408 = vmul.f32 %v1404, %v1107
      %v1409 = vadd.f32 %v1407, %v1408
      %v1410 = vpack.c.bf16 %v1409, %v1409
      %1411 = vst [vmem:[#allocation16 + $0xc] sm:$0xf] %v1410
      %v1412 = vld [vmem:[#allocation3] sm:$0xff]
      %1413 = vmatprep.subr.mxu0 0.0
      %1414 = vmatpush1.msra.mxu0 %v1105
      %1415 = vmatprep.subr.mxu0 0.0
      %1416 = vmatpush1.msra.mxu0 %v1104
      %1417 = vmatprep.subr.mxu0 0.0
      %1418 = vmatpush1.msra.mxu0 %v1103
      %1419 = vmatprep.subr.mxu0 0.0
      %1420 = vmatpush1.msra.mxu0 %v1102
      %1421 = vmatprep.subr.mxu0 0.0
      %1422 = vmatpush1.msra.mxu0 %v1101
      %1423 = vmatprep.subr.mxu0 0.0
      %1424 = vmatpush1.msra.mxu0 %v1100
      %1425 = vmatprep.subr.mxu0 0.0
      %1426 = vmatpush1.msra.mxu0 %v1099
      %1427 = vmatprep.subr.mxu0 0.0
      %1428 = vmatpush1.msra.mxu0 %v1098
      %1429 = vmatprep.subr.mxu0 0.0
      %1430 = vmatpush1.msra.mxu0 %v1097
      %1431 = vmatprep.subr.mxu0 0.0
      %1432 = vmatpush1.msra.mxu0 %v1096
      %1433 = vmatprep.subr.mxu0 0.0
      %1434 = vmatpush1.msra.mxu0 %v1095
      %1435 = vmatprep.subr.mxu0 0.0
      %1436 = vmatpush1.msra.mxu0 %v1094
      %1437 = vmatprep.subr.mxu0 0.0
      %1438 = vmatpush1.msra.mxu0 %v1093
      %1439 = vmatprep.subr.mxu0 0.0
      %1440 = vmatpush1.msra.mxu0 %v1092
      %1441 = vmatprep.subr.mxu0 0.0
      %1442 = vmatpush1.msra.mxu0 %v1091
      %1443 = vmatprep.subr.mxu0 0.0
      %1444 = vmatpush1.msra.mxu0 %v1090
      %1445 = vmatprep.subr.mxu0 0.0
      %1446 = vmatpush2.msra.mxu0 0.0
      %1447 = vmatprep.subr.mxu0 0.0
      %1448 = vmatpush2.msra.mxu0 0.0
      %1449 = vmatprep.subr.mxu0 0.0
      %1450 = vmatpush2.msra.mxu0 0.0
      %1451 = vmatprep.subr.mxu0 0.0
      %1452 = vmatpush2.msra.mxu0 0.0
      %1453 = vmatprep.subr.mxu0 0.0
      %1454 = vmatpush2.msra.mxu0 0.0
      %1455 = vmatprep.subr.mxu0 0.0
      %1456 = vmatpush2.msra.mxu0 0.0
      %1457 = vmatprep.subr.mxu0 0.0
      %1458 = vmatpush2.msra.mxu0 0.0
      %1459 = vmatprep.subr.mxu0 0.0
      %1460 = vmatpush2.msra.mxu0 0.0
      %1461 = vmatprep.subr.mxu0 0.0
      %1462 = vmatpush2.msra.mxu0 0.0
      %1463 = vmatprep.subr.mxu0 0.0
      %1464 = vmatpush2.msra.mxu0 0.0
      %1465 = vmatprep.subr.mxu0 0.0
      %1466 = vmatpush2.msra.mxu0 0.0
      %1467 = vmatprep.subr.mxu0 0.0
      %1468 = vmatpush2.msra.mxu0 0.0
      %1469 = vmatprep.subr.mxu0 0.0
      %1470 = vmatpush2.msra.mxu0 0.0
      %1471 = vmatprep.subr.mxu0 0.0
      %1472 = vmatpush2.msra.mxu0 0.0
      %1473 = vmatprep.subr.mxu0 0.0
      %1474 = vmatpush2.msra.mxu0 0.0
      %1475 = vmatprep.subr.mxu0 0.0
      %1476 = vmatpush2.msra.mxu0 0.0
      %1477 = vmatprep.mubr.f32.mxu0 0.0
      %1478 = vmatmul.mubr.f32.gmra.mxu0 %v1412
      %v1479 = vpop.f32.mrf.mxu0
      %v1480 = vadd.f32 0.0, %v1479
      %v1481 = vpop.f32.mrf.mxu0
      %1482 = vdwg.mxu0
      %v1483 = vmul.f32 %v1412, %v1088
      %v1484 = vmul.f32 %v1480, %v1089
      %v1485 = vadd.f32 %v1483, %v1484
      %v1486 = vpack.c.bf16 %v1485, %v1485
      %1487 = vst [vmem:[#allocation17] sm:$0xf] %v1486
      %v1488 = vld [vmem:[#allocation3 + $0x8] sm:$0xff]
      %1489 = vmatprep.subr.mxu0 0.0
      %1490 = vmatpush1.msra.mxu0 %v1105
      %1491 = vmatprep.subr.mxu0 0.0
      %1492 = vmatpush1.msra.mxu0 %v1104
      %1493 = vmatprep.subr.mxu0 0.0
      %1494 = vmatpush1.msra.mxu0 %v1103
      %1495 = vmatprep.subr.mxu0 0.0
      %1496 = vmatpush1.msra.mxu0 %v1102
      %1497 = vmatprep.subr.mxu0 0.0
      %1498 = vmatpush1.msra.mxu0 %v1101
      %1499 = vmatprep.subr.mxu0 0.0
      %1500 = vmatpush1.msra.mxu0 %v1100
      %1501 = vmatprep.subr.mxu0 0.0
      %1502 = vmatpush1.msra.mxu0 %v1099
      %1503 = vmatprep.subr.mxu0 0.0
      %1504 = vmatpush1.msra.mxu0 %v1098
      %1505 = vmatprep.subr.mxu0 0.0
      %1506 = vmatpush1.msra.mxu0 %v1097
      %1507 = vmatprep.subr.mxu0 0.0
      %1508 = vmatpush1.msra.mxu0 %v1096
      %1509 = vmatprep.subr.mxu0 0.0
      %1510 = vmatpush1.msra.mxu0 %v1095
      %1511 = vmatprep.subr.mxu0 0.0
      %1512 = vmatpush1.msra.mxu0 %v1094
      %1513 = vmatprep.subr.mxu0 0.0
      %1514 = vmatpush1.msra.mxu0 %v1093
      %1515 = vmatprep.subr.mxu0 0.0
      %1516 = vmatpush1.msra.mxu0 %v1092
      %1517 = vmatprep.subr.mxu0 0.0
      %1518 = vmatpush1.msra.mxu0 %v1091
      %1519 = vmatprep.subr.mxu0 0.0
      %1520 = vmatpush1.msra.mxu0 %v1090
      %1521 = vmatprep.subr.mxu0 0.0
      %1522 = vmatpush2.msra.mxu0 0.0
      %1523 = vmatprep.subr.mxu0 0.0
      %1524 = vmatpush2.msra.mxu0 0.0
      %1525 = vmatprep.subr.mxu0 0.0
      %1526 = vmatpush2.msra.mxu0 0.0
      %1527 = vmatprep.subr.mxu0 0.0
      %1528 = vmatpush2.msra.mxu0 0.0
      %1529 = vmatprep.subr.mxu0 0.0
      %1530 = vmatpush2.msra.mxu0 0.0
      %1531 = vmatprep.subr.mxu0 0.0
      %1532 = vmatpush2.msra.mxu0 0.0
      %1533 = vmatprep.subr.mxu0 0.0
      %1534 = vmatpush2.msra.mxu0 0.0
      %1535 = vmatprep.subr.mxu0 0.0
      %1536 = vmatpush2.msra.mxu0 0.0
      %1537 = vmatprep.subr.mxu0 0.0
      %1538 = vmatpush2.msra.mxu0 0.0
      %1539 = vmatprep.subr.mxu0 0.0
      %1540 = vmatpush2.msra.mxu0 0.0
      %1541 = vmatprep.subr.mxu0 0.0
      %1542 = vmatpush2.msra.mxu0 0.0
      %1543 = vmatprep.subr.mxu0 0.0
      %1544 = vmatpush2.msra.mxu0 0.0
      %1545 = vmatprep.subr.mxu0 0.0
      %1546 = vmatpush2.msra.mxu0 0.0
      %1547 = vmatprep.subr.mxu0 0.0
      %1548 = vmatpush2.msra.mxu0 0.0
      %1549 = vmatprep.subr.mxu0 0.0
      %1550 = vmatpush2.msra.mxu0 0.0
      %1551 = vmatprep.subr.mxu0 0.0
      %1552 = vmatpush2.msra.mxu0 0.0
      %1553 = vmatprep.mubr.f32.mxu0 0.0
      %1554 = vmatmul.mubr.f32.gmra.mxu0 %v1488
      %v1555 = vpop.f32.mrf.mxu0
      %v1556 = vadd.f32 0.0, %v1555
      %v1557 = vpop.f32.mrf.mxu0
      %1558 = vdwg.mxu0
      %v1559 = vmul.f32 %v1488, %v1088
      %v1560 = vmul.f32 %v1556, %v1089
      %v1561 = vadd.f32 %v1559, %v1560
      %v1562 = vpack.c.bf16 %v1561, %v1561
      %1563 = vst [vmem:[#allocation17 + $0x4] sm:$0xf] %v1562
      %v1564 = vld [vmem:[#allocation4] sm:$0xff]
      %v1565 = vld [vmem:[#allocation4 + $0x8] sm:$0xff]
      %v1566 = vpack.c.bf16 %v1564, %v1564
      %v1567 = vpack.c.bf16 %v1565, %v1565
      %v1570 = vunpack.c.l.b16 %v1566
      %v1571 = vunpack.c.l.b16 %v1567
      %v1572 = vpack.c.b16 %v1571, %v1570
      %1574 = vst [vmem:[#allocation19] sm:$0xff] %v1572
    $region61: #{tpu_custom_call.1} parent=1 // pred_fallthru
      _
    // Predicated region
    $region62: #{tpu_custom_call.1} parent=1 // pred_check
      _
    $region63: #{tpu_custom_call.1} parent=1 // pred_check_branch
      %1576 = sbr.rel (0) target = $region65
    $region64: #{tpu_custom_call.1} parent=1 // pred_region
      %s1578 = ssub.s32 256, 256
      %1579 = vsyncadd [#allocation7], %s1578
      %s1581 = sshll.u32 [#allocation16], 4
      %s1582 = int_to_ptr.vmem [resolvable:$true] %s1581
      %1584 = dma.vmem_to_hbm [thread:$0]  %s1582, 256, %s7, [#allocation7]
    $region65: #{tpu_custom_call.1} parent=1 // pred_fallthru
      _
    // Predicated region
    $region66: #{tpu_custom_call.1} parent=1 // pred_check
      _
    $region67: #{tpu_custom_call.1} parent=1 // pred_check_branch
      %1586 = sbr.rel (0) target = $region69
    $region68: #{tpu_custom_call.1} parent=1 // pred_region
      %s1588 = ssub.s32 128, 128
      %1589 = vsyncadd [#allocation18], %s1588
      %s1591 = sshll.u32 [#allocation17], 4
      %s1592 = int_to_ptr.vmem [resolvable:$true] %s1591
      %1594 = dma.vmem_to_hbm [thread:$0]  %s1592, 128, %s8, [#allocation18]
    $region69: #{tpu_custom_call.1} parent=1 // pred_fallthru
      _
    // Predicated region
    $region70: #{tpu_custom_call.1} parent=1 // pred_check
      _
    $region71: #{tpu_custom_call.1} parent=1 // pred_check_branch
      %1596 = sbr.rel (0) target = $region73
    $region72: #{tpu_custom_call.1} parent=1 // pred_region
      %s1598 = ssub.s32 128, 128
      %1599 = vsyncadd [#allocation18], %s1598
      %s1601 = sshll.u32 [#allocation19], 4
      %s1602 = int_to_ptr.vmem [resolvable:$true] %s1601
      %1604 = dma.vmem_to_hbm [thread:$0]  %s1602, 128, %s9, [#allocation18]
    $region73: #{tpu_custom_call.1} parent=1 // pred_fallthru
      _
    // Predicated region
    $region74: #{tpu_custom_call.1} parent=1 // pred_check
      _
    $region75: #{tpu_custom_call.1} parent=1 // pred_check_branch
      %1606 = sbr.rel (0) target = $region77
    $region76: #{tpu_custom_call.1} parent=1 // pred_region
      %1607 = dma.done [#allocation7], 256
    $region77: #{tpu_custom_call.1} parent=1 // pred_fallthru
      _
    // Predicated region
    $region78: #{tpu_custom_call.1} parent=1 // pred_check
      _
    $region79: #{tpu_custom_call.1} parent=1 // pred_check_branch
      %1609 = sbr.rel (0) target = $region81
    $region80: #{tpu_custom_call.1} parent=1 // pred_region
      %1610 = dma.done [#allocation18], 128
    $region81: #{tpu_custom_call.1} parent=1 // pred_fallthru
      _
    // Predicated region
    $region82: #{tpu_custom_call.1} parent=1 // pred_check
      _
    $region83: #{tpu_custom_call.1} parent=1 // pred_check_branch
      %1612 = sbr.rel (0) target = $region85
    $region84: #{tpu_custom_call.1} parent=1 // pred_region
      %1613 = dma.done [#allocation18], 128
    $region85: #{tpu_custom_call.1} parent=1 // pred_fallthru
      _
    %1614 = vsyncpa [#allocation6], 1
    %1615 = vsyncpa [#allocation9], 1
    %1616 = vsyncpa [#allocation12], 1
    %1617 = vsyncpa [#allocation15], 1
    %1618 = vsyncpa [#allocation7], 1
    %1619 = vsyncpa [#allocation18], 1

</llo_original>
